<compile_context>
chip_gen: v7x
topology: tpu7x:2x2x1
jax: 0.10.0
libtpu: 0.0.40
codegen_flags: <defaults>
</compile_context>

<pallas_src>
import jax
import jax.numpy as jnp
import numpy as np
from jax.experimental import pallas as pl
from jax.experimental.pallas import tpu as pltpu


def _round_up(x, m):
    return (x + m - 1) // m * m


def _pick_batch_block(B):
    # Review #8: minimize padded-batch waste; tie-break toward the larger block to
    # amortize per-grid-step pipeline overhead.
    cands = (8, 16, 32)
    waste = {bb: _round_up(B, bb) - B for bb in cands}
    best = min(waste.values())
    return max(bb for bb in cands if waste[bb] == best)


def _make_kernel(k_size, W, HWp, lchunk):
    kk = k_size * k_size

    def kernel(cols_ref, w_ref, b_ref, o_ref):
        # cols_ref: (k, Bb, SWp) VMEM; cols_ref[b][n, r*W + w] == pad(x, k//2)[n, r, w + b]
        #           (only k column-shifted copies live in HBM; row shifts are lane slices).
        # w_ref:    (k^4,) SMEM  flattened Conv2d weight, layout [c, p, q]
        # b_ref:    (k^2,) SMEM  Conv2d bias
        # o_ref:    (Bb, HWp) VMEM  cropped HxW output, flattened on the lane axis
        for c0 in range(0, HWp, lchunk):
            # The k^2 shifted HxW windows restricted to this lane chunk: shift (a, b)
            # == contiguous lane slice at offset a*W of column-shifted copy b.
            tl = [cols_ref[b, :, pl.ds(a * W + c0, lchunk)]
                  for a in range(k_size) for b in range(k_size)]
            acc = None
            for i in range(k_size):
                for j in range(k_size):
                    c = k_size * i + j
                    # firstConv channel c on this chunk: lane-dense scalar*tile MACs (VPU).
                    fc = tl[0] * w_ref[c * kk + 0]
                    for t in range(1, kk):
                        fc = fc + tl[t] * w_ref[c * kk + t]
                    fc = fc + b_ref[c]                      # single scalar bias add
                    # shifted-x copy for channel (i, j) is window (a=j, b=i) -- see header.
                    term = tl[k_size * j + i] * jnp.tanh(fc)
                    acc = term if acc is None else acc + term
            o_ref[:, pl.ds(c0, lchunk)] = acc

    return kernel


def dynamic_kernel_forward(x, conv_w, conv_b, k_size):
    """x: (B, 1, H, W) f32, conv_w: (k*k, 1, k, k), conv_b: (k*k,)  ->  (B, 1, H, W)."""
    B, C, H, W = x.shape
    assert C == 1 and k_size % 2 == 1
    pad = k_size // 2
    k = k_size
    kk = k * k
    HW = H * W

    HWp = _round_up(HW, 128)                 # lane axis = flattened H*W (output)
    Bb = _pick_batch_block(B)                # sublane axis = batch block
    B_pad = _round_up(B, Bb)

    S = H + k - 1                            # rows of pad(x, pad)
    # Enough lanes that every in-kernel slice (offset up to (k-1)*W, length up to HWp)
    # stays in bounds of the allocation.
    SWp = _round_up(max(S * W, (k - 1) * W + HWp), 128)

    x_tmp = jnp.pad(x[:, 0].astype(jnp.float32),
                    ((0, B_pad - B), (pad, pad), (pad, pad)))        # (B_pad, S, W+k-1)

    # Only k column-shifted copies (v2 materialized k^2 shifted windows -> 9x duplication).
    cols = jnp.stack(
        [x_tmp[:, :, b:b + W].reshape(B_pad, S * W) for b in range(k)], axis=0)
    cols = jnp.pad(cols, ((0, 0), (0, 0), (0, SWp - S * W)))          # (k, B_pad, SWp)

    w_flat = conv_w.reshape(-1).astype(jnp.float32)                   # (k^4,) layout [c, p, q]
    b_flat = conv_b.astype(jnp.float32)                               # (k^2,)

    # Lane-chunk size for the in-kernel loop: keeps ~(kk+3) * (Bb/8)*(lchunk/128) vregs live.
    lchunk = min(max(128, 2048 // Bb), HWp)
    while HWp % lchunk:
        lchunk -= 128

    cost = pl.CostEstimate(
        flops=2 * kk * (kk + 1) * B_pad * HW,
        transcendentals=kk * B_pad * HW,
        bytes_accessed=(k * SWp + HWp) * B_pad * 4 + (kk * kk + kk) * 4,
    )

    out = pl.pallas_call(
        _make_kernel(k, W, HWp, lchunk),
        out_shape=jax.ShapeDtypeStruct((B_pad, HWp), jnp.float32),
        grid_spec=pltpu.PrefetchScalarGridSpec(
            num_scalar_prefetch=0,
            grid=(B_pad // Bb,),
            in_specs=[
                pl.BlockSpec((k, Bb, SWp), lambda n: (0, n, 0)),
                pl.BlockSpec(memory_space=pltpu.MemorySpace.SMEM),
                pl.BlockSpec(memory_space=pltpu.MemorySpace.SMEM),
            ],
            out_specs=pl.BlockSpec((Bb, HWp), lambda n: (n, 0)),
        ),
        compiler_params=pltpu.CompilerParams(
            dimension_semantics=("parallel",),       # batch blocks shard across TCs (v7x)
        ),
        cost_estimate=cost,
    )(cols, w_flat, b_flat)

    return out[:B, :HW].reshape(B, 1, H, W)


def reference_forward(x, conv_w, conv_b, k_size):
    """Plain-JAX mirror of the PyTorch forward (for verification)."""
    B, _, H, W = x.shape
    pad = k_size // 2
    x_tmp = jnp.pad(x, ((0, 0), (0, 0), (pad, pad), (pad, pad)))
    fc = jax.lax.conv_general_dilated(
        x_tmp, conv_w, window_strides=(1, 1),
        padding=[(pad, pad), (pad, pad)],
        dimension_numbers=("NCHW", "OIHW", "NCHW"),
        precision=jax.lax.Precision.HIGHEST,
    ) + conv_b[None, :, None, None]
    S = H + k_size - 1
    out = jnp.zeros((B, 1, S, S), jnp.float32)
    for i in range(k_size):
        for j in range(k_size):
            xpij = jnp.pad(x, ((0, 0), (0, 0), (k_size - 1 - j, j), (k_size - 1 - i, i)))
            out = out + xpij * jnp.tanh(fc[:, k_size * i + j])[:, None]
    return out[:, :, pad:-pad, pad:-pad]


def _run_case(key, B, H, k_size):
    kx, kw, kb = jax.random.split(key, 3)
    x = jax.random.normal(kx, (B, 1, H, H), jnp.float32)
    fan_in = 1 * k_size * k_size
    bound = 1.0 / np.sqrt(fan_in)
    conv_w = jax.random.uniform(kw, (k_size * k_size, 1, k_size, k_size),
                                jnp.float32, -bound, bound)
    conv_b = jax.random.uniform(kb, (k_size * k_size,), jnp.float32, -bound, bound)

    out = dynamic_kernel_forward(x, conv_w, conv_b, k_size)
    out = jax.block_until_ready(out)
    ref = reference_forward(x, conv_w, conv_b, k_size)
    np.testing.assert_allclose(np.asarray(out), np.asarray(ref), rtol=1e-5, atol=1e-5)


if __name__ == "__main__":
    # Note: self.h and self.QConv in the PyTorch module are never used in forward(); omitted.
    key = jax.random.PRNGKey(0)
    k0, k1, k2, k3 = jax.random.split(key, 4)
    _run_case(k0, B=2, H=16, k_size=3)   # baseline small shape (Bb=8, single lane chunk)
    _run_case(k1, B=5, H=12, k_size=3)   # batch padding (5->8) + lane padding (144->256)
    _run_case(k2, B=4, H=32, k_size=3)   # CIFAR spatial size, multi-chunk inner loop
    _run_case(k3, B=64, H=16, k_size=3)  # module batch size: Bb=32, 2 grid steps
    print("KERNEL_OK")
</pallas_src>

<mosaic_0001>
module attributes {stable_mosaic.version = 11 : i64} {
  func.func @kernel(%arg0: i32, %arg1: memref<3x8x384xf32, #tpu.memory_space<vmem>>, %arg2: memref<81xf32, #tpu.memory_space<smem>>, %arg3: memref<9xf32, #tpu.memory_space<smem>>, %arg4: memref<8x256xf32, #tpu.memory_space<vmem>>) attributes {dimension_semantics = [#tpu.dimension_semantics<parallel>], iteration_bounds = array<i64: 1>, scalar_prefetch = 0 : i64, scratch_operands = 0 : i64, tpu.core_type = #tpu.core_type<tc>, window_params = [{transform_indices = @transform_0, window_bounds = array<i64: 3, 8, 384>}, {transform_indices = @transform_1, window_bounds = array<i64: 81>}, {transform_indices = @transform_2, window_bounds = array<i64: 9>}, {transform_indices = @transform_3, window_bounds = array<i64: 8, 256>}]} {
    %c0 = arith.constant 0 : index
    %c0_0 = arith.constant 0 : index
    %c0_1 = arith.constant 0 : index
    %0 = vector.load %arg1[%c0, %c0_0, %c0_1] : memref<3x8x384xf32, #tpu.memory_space<vmem>>, vector<1x8x256xf32>
    %1 = vector.shape_cast %0 : vector<1x8x256xf32> to vector<8x256xf32>
    %c1 = arith.constant 1 : index
    %c0_2 = arith.constant 0 : index
    %c0_3 = arith.constant 0 : index
    %2 = vector.load %arg1[%c1, %c0_2, %c0_3] : memref<3x8x384xf32, #tpu.memory_space<vmem>>, vector<1x8x256xf32>
    %3 = vector.shape_cast %2 : vector<1x8x256xf32> to vector<8x256xf32>
    %c2 = arith.constant 2 : index
    %c0_4 = arith.constant 0 : index
    %c0_5 = arith.constant 0 : index
    %4 = vector.load %arg1[%c2, %c0_4, %c0_5] : memref<3x8x384xf32, #tpu.memory_space<vmem>>, vector<1x8x256xf32>
    %5 = vector.shape_cast %4 : vector<1x8x256xf32> to vector<8x256xf32>
    %c0_6 = arith.constant 0 : index
    %c0_7 = arith.constant 0 : index
    %c16 = arith.constant 16 : index
    %6 = vector.load %arg1[%c0_6, %c0_7, %c16] : memref<3x8x384xf32, #tpu.memory_space<vmem>>, vector<1x8x256xf32>
    %7 = vector.shape_cast %6 : vector<1x8x256xf32> to vector<8x256xf32>
    %c1_8 = arith.constant 1 : index
    %c0_9 = arith.constant 0 : index
    %c16_10 = arith.constant 16 : index
    %8 = vector.load %arg1[%c1_8, %c0_9, %c16_10] : memref<3x8x384xf32, #tpu.memory_space<vmem>>, vector<1x8x256xf32>
    %9 = vector.shape_cast %8 : vector<1x8x256xf32> to vector<8x256xf32>
    %c2_11 = arith.constant 2 : index
    %c0_12 = arith.constant 0 : index
    %c16_13 = arith.constant 16 : index
    %10 = vector.load %arg1[%c2_11, %c0_12, %c16_13] : memref<3x8x384xf32, #tpu.memory_space<vmem>>, vector<1x8x256xf32>
    %11 = vector.shape_cast %10 : vector<1x8x256xf32> to vector<8x256xf32>
    %c0_14 = arith.constant 0 : index
    %c0_15 = arith.constant 0 : index
    %c32 = arith.constant 32 : index
    %12 = vector.load %arg1[%c0_14, %c0_15, %c32] : memref<3x8x384xf32, #tpu.memory_space<vmem>>, vector<1x8x256xf32>
    %13 = vector.shape_cast %12 : vector<1x8x256xf32> to vector<8x256xf32>
    %c1_16 = arith.constant 1 : index
    %c0_17 = arith.constant 0 : index
    %c32_18 = arith.constant 32 : index
    %14 = vector.load %arg1[%c1_16, %c0_17, %c32_18] : memref<3x8x384xf32, #tpu.memory_space<vmem>>, vector<1x8x256xf32>
    %15 = vector.shape_cast %14 : vector<1x8x256xf32> to vector<8x256xf32>
    %c2_19 = arith.constant 2 : index
    %c0_20 = arith.constant 0 : index
    %c32_21 = arith.constant 32 : index
    %16 = vector.load %arg1[%c2_19, %c0_20, %c32_21] : memref<3x8x384xf32, #tpu.memory_space<vmem>>, vector<1x8x256xf32>
    %17 = vector.shape_cast %16 : vector<1x8x256xf32> to vector<8x256xf32>
    %c0_22 = arith.constant 0 : index
    %18 = memref.load %arg2[%c0_22] : memref<81xf32, #tpu.memory_space<smem>>
    %19 = vector.broadcast %18 : f32 to vector<8x256xf32>
    %20 = arith.mulf %1, %19 : vector<8x256xf32>
    %c1_23 = arith.constant 1 : index
    %21 = memref.load %arg2[%c1_23] : memref<81xf32, #tpu.memory_space<smem>>
    %22 = vector.broadcast %21 : f32 to vector<8x256xf32>
    %23 = arith.mulf %3, %22 : vector<8x256xf32>
    %24 = arith.addf %20, %23 : vector<8x256xf32>
    %c2_24 = arith.constant 2 : index
    %25 = memref.load %arg2[%c2_24] : memref<81xf32, #tpu.memory_space<smem>>
    %26 = vector.broadcast %25 : f32 to vector<8x256xf32>
    %27 = arith.mulf %5, %26 : vector<8x256xf32>
    %28 = arith.addf %24, %27 : vector<8x256xf32>
    %c3 = arith.constant 3 : index
    %29 = memref.load %arg2[%c3] : memref<81xf32, #tpu.memory_space<smem>>
    %30 = vector.broadcast %29 : f32 to vector<8x256xf32>
    %31 = arith.mulf %7, %30 : vector<8x256xf32>
    %32 = arith.addf %28, %31 : vector<8x256xf32>
    %c4 = arith.constant 4 : index
    %33 = memref.load %arg2[%c4] : memref<81xf32, #tpu.memory_space<smem>>
    %34 = vector.broadcast %33 : f32 to vector<8x256xf32>
    %35 = arith.mulf %9, %34 : vector<8x256xf32>
    %36 = arith.addf %32, %35 : vector<8x256xf32>
    %c5 = arith.constant 5 : index
    %37 = memref.load %arg2[%c5] : memref<81xf32, #tpu.memory_space<smem>>
    %38 = vector.broadcast %37 : f32 to vector<8x256xf32>
    %39 = arith.mulf %11, %38 : vector<8x256xf32>
    %40 = arith.addf %36, %39 : vector<8x256xf32>
    %c6 = arith.constant 6 : index
    %41 = memref.load %arg2[%c6] : memref<81xf32, #tpu.memory_space<smem>>
    %42 = vector.broadcast %41 : f32 to vector<8x256xf32>
    %43 = arith.mulf %13, %42 : vector<8x256xf32>
    %44 = arith.addf %40, %43 : vector<8x256xf32>
    %c7 = arith.constant 7 : index
    %45 = memref.load %arg2[%c7] : memref<81xf32, #tpu.memory_space<smem>>
    %46 = vector.broadcast %45 : f32 to vector<8x256xf32>
    %47 = arith.mulf %15, %46 : vector<8x256xf32>
    %48 = arith.addf %44, %47 : vector<8x256xf32>
    %c8 = arith.constant 8 : index
    %49 = memref.load %arg2[%c8] : memref<81xf32, #tpu.memory_space<smem>>
    %50 = vector.broadcast %49 : f32 to vector<8x256xf32>
    %51 = arith.mulf %17, %50 : vector<8x256xf32>
    %52 = arith.addf %48, %51 : vector<8x256xf32>
    %c0_25 = arith.constant 0 : index
    %53 = memref.load %arg3[%c0_25] : memref<9xf32, #tpu.memory_space<smem>>
    %54 = vector.broadcast %53 : f32 to vector<8x256xf32>
    %55 = arith.addf %52, %54 : vector<8x256xf32>
    %56 = math.tanh %55 : vector<8x256xf32>
    %57 = arith.mulf %1, %56 : vector<8x256xf32>
    %c9 = arith.constant 9 : index
    %58 = memref.load %arg2[%c9] : memref<81xf32, #tpu.memory_space<smem>>
    %59 = vector.broadcast %58 : f32 to vector<8x256xf32>
    %60 = arith.mulf %1, %59 : vector<8x256xf32>
    %c10 = arith.constant 10 : index
    %61 = memref.load %arg2[%c10] : memref<81xf32, #tpu.memory_space<smem>>
    %62 = vector.broadcast %61 : f32 to vector<8x256xf32>
    %63 = arith.mulf %3, %62 : vector<8x256xf32>
    %64 = arith.addf %60, %63 : vector<8x256xf32>
    %c11 = arith.constant 11 : index
    %65 = memref.load %arg2[%c11] : memref<81xf32, #tpu.memory_space<smem>>
    %66 = vector.broadcast %65 : f32 to vector<8x256xf32>
    %67 = arith.mulf %5, %66 : vector<8x256xf32>
    %68 = arith.addf %64, %67 : vector<8x256xf32>
    %c12 = arith.constant 12 : index
    %69 = memref.load %arg2[%c12] : memref<81xf32, #tpu.memory_space<smem>>
    %70 = vector.broadcast %69 : f32 to vector<8x256xf32>
    %71 = arith.mulf %7, %70 : vector<8x256xf32>
    %72 = arith.addf %68, %71 : vector<8x256xf32>
    %c13 = arith.constant 13 : index
    %73 = memref.load %arg2[%c13] : memref<81xf32, #tpu.memory_space<smem>>
    %74 = vector.broadcast %73 : f32 to vector<8x256xf32>
    %75 = arith.mulf %9, %74 : vector<8x256xf32>
    %76 = arith.addf %72, %75 : vector<8x256xf32>
    %c14 = arith.constant 14 : index
    %77 = memref.load %arg2[%c14] : memref<81xf32, #tpu.memory_space<smem>>
    %78 = vector.broadcast %77 : f32 to vector<8x256xf32>
    %79 = arith.mulf %11, %78 : vector<8x256xf32>
    %80 = arith.addf %76, %79 : vector<8x256xf32>
    %c15 = arith.constant 15 : index
    %81 = memref.load %arg2[%c15] : memref<81xf32, #tpu.memory_space<smem>>
    %82 = vector.broadcast %81 : f32 to vector<8x256xf32>
    %83 = arith.mulf %13, %82 : vector<8x256xf32>
    %84 = arith.addf %80, %83 : vector<8x256xf32>
    %c16_26 = arith.constant 16 : index
    %85 = memref.load %arg2[%c16_26] : memref<81xf32, #tpu.memory_space<smem>>
    %86 = vector.broadcast %85 : f32 to vector<8x256xf32>
    %87 = arith.mulf %15, %86 : vector<8x256xf32>
    %88 = arith.addf %84, %87 : vector<8x256xf32>
    %c17 = arith.constant 17 : index
    %89 = memref.load %arg2[%c17] : memref<81xf32, #tpu.memory_space<smem>>
    %90 = vector.broadcast %89 : f32 to vector<8x256xf32>
    %91 = arith.mulf %17, %90 : vector<8x256xf32>
    %92 = arith.addf %88, %91 : vector<8x256xf32>
    %c1_27 = arith.constant 1 : index
    %93 = memref.load %arg3[%c1_27] : memref<9xf32, #tpu.memory_space<smem>>
    %94 = vector.broadcast %93 : f32 to vector<8x256xf32>
    %95 = arith.addf %92, %94 : vector<8x256xf32>
    %96 = math.tanh %95 : vector<8x256xf32>
    %97 = arith.mulf %7, %96 : vector<8x256xf32>
    %98 = arith.addf %57, %97 : vector<8x256xf32>
    %c18 = arith.constant 18 : index
    %99 = memref.load %arg2[%c18] : memref<81xf32, #tpu.memory_space<smem>>
    %100 = vector.broadcast %99 : f32 to vector<8x256xf32>
    %101 = arith.mulf %1, %100 : vector<8x256xf32>
    %c19 = arith.constant 19 : index
    %102 = memref.load %arg2[%c19] : memref<81xf32, #tpu.memory_space<smem>>
    %103 = vector.broadcast %102 : f32 to vector<8x256xf32>
    %104 = arith.mulf %3, %103 : vector<8x256xf32>
    %105 = arith.addf %101, %104 : vector<8x256xf32>
    %c20 = arith.constant 20 : index
    %106 = memref.load %arg2[%c20] : memref<81xf32, #tpu.memory_space<smem>>
    %107 = vector.broadcast %106 : f32 to vector<8x256xf32>
    %108 = arith.mulf %5, %107 : vector<8x256xf32>
    %109 = arith.addf %105, %108 : vector<8x256xf32>
    %c21 = arith.constant 21 : index
    %110 = memref.load %arg2[%c21] : memref<81xf32, #tpu.memory_space<smem>>
    %111 = vector.broadcast %110 : f32 to vector<8x256xf32>
    %112 = arith.mulf %7, %111 : vector<8x256xf32>
    %113 = arith.addf %109, %112 : vector<8x256xf32>
    %c22 = arith.constant 22 : index
    %114 = memref.load %arg2[%c22] : memref<81xf32, #tpu.memory_space<smem>>
    %115 = vector.broadcast %114 : f32 to vector<8x256xf32>
    %116 = arith.mulf %9, %115 : vector<8x256xf32>
    %117 = arith.addf %113, %116 : vector<8x256xf32>
    %c23 = arith.constant 23 : index
    %118 = memref.load %arg2[%c23] : memref<81xf32, #tpu.memory_space<smem>>
    %119 = vector.broadcast %118 : f32 to vector<8x256xf32>
    %120 = arith.mulf %11, %119 : vector<8x256xf32>
    %121 = arith.addf %117, %120 : vector<8x256xf32>
    %c24 = arith.constant 24 : index
    %122 = memref.load %arg2[%c24] : memref<81xf32, #tpu.memory_space<smem>>
    %123 = vector.broadcast %122 : f32 to vector<8x256xf32>
    %124 = arith.mulf %13, %123 : vector<8x256xf32>
    %125 = arith.addf %121, %124 : vector<8x256xf32>
    %c25 = arith.constant 25 : index
    %126 = memref.load %arg2[%c25] : memref<81xf32, #tpu.memory_space<smem>>
    %127 = vector.broadcast %126 : f32 to vector<8x256xf32>
    %128 = arith.mulf %15, %127 : vector<8x256xf32>
    %129 = arith.addf %125, %128 : vector<8x256xf32>
    %c26 = arith.constant 26 : index
    %130 = memref.load %arg2[%c26] : memref<81xf32, #tpu.memory_space<smem>>
    %131 = vector.broadcast %130 : f32 to vector<8x256xf32>
    %132 = arith.mulf %17, %131 : vector<8x256xf32>
    %133 = arith.addf %129, %132 : vector<8x256xf32>
    %c2_28 = arith.constant 2 : index
    %134 = memref.load %arg3[%c2_28] : memref<9xf32, #tpu.memory_space<smem>>
    %135 = vector.broadcast %134 : f32 to vector<8x256xf32>
    %136 = arith.addf %133, %135 : vector<8x256xf32>
    %137 = math.tanh %136 : vector<8x256xf32>
    %138 = arith.mulf %13, %137 : vector<8x256xf32>
    %139 = arith.addf %98, %138 : vector<8x256xf32>
    %c27 = arith.constant 27 : index
    %140 = memref.load %arg2[%c27] : memref<81xf32, #tpu.memory_space<smem>>
    %141 = vector.broadcast %140 : f32 to vector<8x256xf32>
    %142 = arith.mulf %1, %141 : vector<8x256xf32>
    %c28 = arith.constant 28 : index
    %143 = memref.load %arg2[%c28] : memref<81xf32, #tpu.memory_space<smem>>
    %144 = vector.broadcast %143 : f32 to vector<8x256xf32>
    %145 = arith.mulf %3, %144 : vector<8x256xf32>
    %146 = arith.addf %142, %145 : vector<8x256xf32>
    %c29 = arith.constant 29 : index
    %147 = memref.load %arg2[%c29] : memref<81xf32, #tpu.memory_space<smem>>
    %148 = vector.broadcast %147 : f32 to vector<8x256xf32>
    %149 = arith.mulf %5, %148 : vector<8x256xf32>
    %150 = arith.addf %146, %149 : vector<8x256xf32>
    %c30 = arith.constant 30 : index
    %151 = memref.load %arg2[%c30] : memref<81xf32, #tpu.memory_space<smem>>
    %152 = vector.broadcast %151 : f32 to vector<8x256xf32>
    %153 = arith.mulf %7, %152 : vector<8x256xf32>
    %154 = arith.addf %150, %153 : vector<8x256xf32>
    %c31 = arith.constant 31 : index
    %155 = memref.load %arg2[%c31] : memref<81xf32, #tpu.memory_space<smem>>
    %156 = vector.broadcast %155 : f32 to vector<8x256xf32>
    %157 = arith.mulf %9, %156 : vector<8x256xf32>
    %158 = arith.addf %154, %157 : vector<8x256xf32>
    %c32_29 = arith.constant 32 : index
    %159 = memref.load %arg2[%c32_29] : memref<81xf32, #tpu.memory_space<smem>>
    %160 = vector.broadcast %159 : f32 to vector<8x256xf32>
    %161 = arith.mulf %11, %160 : vector<8x256xf32>
    %162 = arith.addf %158, %161 : vector<8x256xf32>
    %c33 = arith.constant 33 : index
    %163 = memref.load %arg2[%c33] : memref<81xf32, #tpu.memory_space<smem>>
    %164 = vector.broadcast %163 : f32 to vector<8x256xf32>
    %165 = arith.mulf %13, %164 : vector<8x256xf32>
    %166 = arith.addf %162, %165 : vector<8x256xf32>
    %c34 = arith.constant 34 : index
    %167 = memref.load %arg2[%c34] : memref<81xf32, #tpu.memory_space<smem>>
    %168 = vector.broadcast %167 : f32 to vector<8x256xf32>
    %169 = arith.mulf %15, %168 : vector<8x256xf32>
    %170 = arith.addf %166, %169 : vector<8x256xf32>
    %c35 = arith.constant 35 : index
    %171 = memref.load %arg2[%c35] : memref<81xf32, #tpu.memory_space<smem>>
    %172 = vector.broadcast %171 : f32 to vector<8x256xf32>
    %173 = arith.mulf %17, %172 : vector<8x256xf32>
    %174 = arith.addf %170, %173 : vector<8x256xf32>
    %c3_30 = arith.constant 3 : index
    %175 = memref.load %arg3[%c3_30] : memref<9xf32, #tpu.memory_space<smem>>
    %176 = vector.broadcast %175 : f32 to vector<8x256xf32>
    %177 = arith.addf %174, %176 : vector<8x256xf32>
    %178 = math.tanh %177 : vector<8x256xf32>
    %179 = arith.mulf %3, %178 : vector<8x256xf32>
    %180 = arith.addf %139, %179 : vector<8x256xf32>
    %c36 = arith.constant 36 : index
    %181 = memref.load %arg2[%c36] : memref<81xf32, #tpu.memory_space<smem>>
    %182 = vector.broadcast %181 : f32 to vector<8x256xf32>
    %183 = arith.mulf %1, %182 : vector<8x256xf32>
    %c37 = arith.constant 37 : index
    %184 = memref.load %arg2[%c37] : memref<81xf32, #tpu.memory_space<smem>>
    %185 = vector.broadcast %184 : f32 to vector<8x256xf32>
    %186 = arith.mulf %3, %185 : vector<8x256xf32>
    %187 = arith.addf %183, %186 : vector<8x256xf32>
    %c38 = arith.constant 38 : index
    %188 = memref.load %arg2[%c38] : memref<81xf32, #tpu.memory_space<smem>>
    %189 = vector.broadcast %188 : f32 to vector<8x256xf32>
    %190 = arith.mulf %5, %189 : vector<8x256xf32>
    %191 = arith.addf %187, %190 : vector<8x256xf32>
    %c39 = arith.constant 39 : index
    %192 = memref.load %arg2[%c39] : memref<81xf32, #tpu.memory_space<smem>>
    %193 = vector.broadcast %192 : f32 to vector<8x256xf32>
    %194 = arith.mulf %7, %193 : vector<8x256xf32>
    %195 = arith.addf %191, %194 : vector<8x256xf32>
    %c40 = arith.constant 40 : index
    %196 = memref.load %arg2[%c40] : memref<81xf32, #tpu.memory_space<smem>>
    %197 = vector.broadcast %196 : f32 to vector<8x256xf32>
    %198 = arith.mulf %9, %197 : vector<8x256xf32>
    %199 = arith.addf %195, %198 : vector<8x256xf32>
    %c41 = arith.constant 41 : index
    %200 = memref.load %arg2[%c41] : memref<81xf32, #tpu.memory_space<smem>>
    %201 = vector.broadcast %200 : f32 to vector<8x256xf32>
    %202 = arith.mulf %11, %201 : vector<8x256xf32>
    %203 = arith.addf %199, %202 : vector<8x256xf32>
    %c42 = arith.constant 42 : index
    %204 = memref.load %arg2[%c42] : memref<81xf32, #tpu.memory_space<smem>>
    %205 = vector.broadcast %204 : f32 to vector<8x256xf32>
    %206 = arith.mulf %13, %205 : vector<8x256xf32>
    %207 = arith.addf %203, %206 : vector<8x256xf32>
    %c43 = arith.constant 43 : index
    %208 = memref.load %arg2[%c43] : memref<81xf32, #tpu.memory_space<smem>>
    %209 = vector.broadcast %208 : f32 to vector<8x256xf32>
    %210 = arith.mulf %15, %209 : vector<8x256xf32>
    %211 = arith.addf %207, %210 : vector<8x256xf32>
    %c44 = arith.constant 44 : index
    %212 = memref.load %arg2[%c44] : memref<81xf32, #tpu.memory_space<smem>>
    %213 = vector.broadcast %212 : f32 to vector<8x256xf32>
    %214 = arith.mulf %17, %213 : vector<8x256xf32>
    %215 = arith.addf %211, %214 : vector<8x256xf32>
    %c4_31 = arith.constant 4 : index
    %216 = memref.load %arg3[%c4_31] : memref<9xf32, #tpu.memory_space<smem>>
    %217 = vector.broadcast %216 : f32 to vector<8x256xf32>
    %218 = arith.addf %215, %217 : vector<8x256xf32>
    %219 = math.tanh %218 : vector<8x256xf32>
    %220 = arith.mulf %9, %219 : vector<8x256xf32>
    %221 = arith.addf %180, %220 : vector<8x256xf32>
    %c45 = arith.constant 45 : index
    %222 = memref.load %arg2[%c45] : memref<81xf32, #tpu.memory_space<smem>>
    %223 = vector.broadcast %222 : f32 to vector<8x256xf32>
    %224 = arith.mulf %1, %223 : vector<8x256xf32>
    %c46 = arith.constant 46 : index
    %225 = memref.load %arg2[%c46] : memref<81xf32, #tpu.memory_space<smem>>
    %226 = vector.broadcast %225 : f32 to vector<8x256xf32>
    %227 = arith.mulf %3, %226 : vector<8x256xf32>
    %228 = arith.addf %224, %227 : vector<8x256xf32>
    %c47 = arith.constant 47 : index
    %229 = memref.load %arg2[%c47] : memref<81xf32, #tpu.memory_space<smem>>
    %230 = vector.broadcast %229 : f32 to vector<8x256xf32>
    %231 = arith.mulf %5, %230 : vector<8x256xf32>
    %232 = arith.addf %228, %231 : vector<8x256xf32>
    %c48 = arith.constant 48 : index
    %233 = memref.load %arg2[%c48] : memref<81xf32, #tpu.memory_space<smem>>
    %234 = vector.broadcast %233 : f32 to vector<8x256xf32>
    %235 = arith.mulf %7, %234 : vector<8x256xf32>
    %236 = arith.addf %232, %235 : vector<8x256xf32>
    %c49 = arith.constant 49 : index
    %237 = memref.load %arg2[%c49] : memref<81xf32, #tpu.memory_space<smem>>
    %238 = vector.broadcast %237 : f32 to vector<8x256xf32>
    %239 = arith.mulf %9, %238 : vector<8x256xf32>
    %240 = arith.addf %236, %239 : vector<8x256xf32>
    %c50 = arith.constant 50 : index
    %241 = memref.load %arg2[%c50] : memref<81xf32, #tpu.memory_space<smem>>
    %242 = vector.broadcast %241 : f32 to vector<8x256xf32>
    %243 = arith.mulf %11, %242 : vector<8x256xf32>
    %244 = arith.addf %240, %243 : vector<8x256xf32>
    %c51 = arith.constant 51 : index
    %245 = memref.load %arg2[%c51] : memref<81xf32, #tpu.memory_space<smem>>
    %246 = vector.broadcast %245 : f32 to vector<8x256xf32>
    %247 = arith.mulf %13, %246 : vector<8x256xf32>
    %248 = arith.addf %244, %247 : vector<8x256xf32>
    %c52 = arith.constant 52 : index
    %249 = memref.load %arg2[%c52] : memref<81xf32, #tpu.memory_space<smem>>
    %250 = vector.broadcast %249 : f32 to vector<8x256xf32>
    %251 = arith.mulf %15, %250 : vector<8x256xf32>
    %252 = arith.addf %248, %251 : vector<8x256xf32>
    %c53 = arith.constant 53 : index
    %253 = memref.load %arg2[%c53] : memref<81xf32, #tpu.memory_space<smem>>
    %254 = vector.broadcast %253 : f32 to vector<8x256xf32>
    %255 = arith.mulf %17, %254 : vector<8x256xf32>
    %256 = arith.addf %252, %255 : vector<8x256xf32>
    %c5_32 = arith.constant 5 : index
    %257 = memref.load %arg3[%c5_32] : memref<9xf32, #tpu.memory_space<smem>>
    %258 = vector.broadcast %257 : f32 to vector<8x256xf32>
    %259 = arith.addf %256, %258 : vector<8x256xf32>
    %260 = math.tanh %259 : vector<8x256xf32>
    %261 = arith.mulf %15, %260 : vector<8x256xf32>
    %262 = arith.addf %221, %261 : vector<8x256xf32>
    %c54 = arith.constant 54 : index
    %263 = memref.load %arg2[%c54] : memref<81xf32, #tpu.memory_space<smem>>
    %264 = vector.broadcast %263 : f32 to vector<8x256xf32>
    %265 = arith.mulf %1, %264 : vector<8x256xf32>
    %c55 = arith.constant 55 : index
    %266 = memref.load %arg2[%c55] : memref<81xf32, #tpu.memory_space<smem>>
    %267 = vector.broadcast %266 : f32 to vector<8x256xf32>
    %268 = arith.mulf %3, %267 : vector<8x256xf32>
    %269 = arith.addf %265, %268 : vector<8x256xf32>
    %c56 = arith.constant 56 : index
    %270 = memref.load %arg2[%c56] : memref<81xf32, #tpu.memory_space<smem>>
    %271 = vector.broadcast %270 : f32 to vector<8x256xf32>
    %272 = arith.mulf %5, %271 : vector<8x256xf32>
    %273 = arith.addf %269, %272 : vector<8x256xf32>
    %c57 = arith.constant 57 : index
    %274 = memref.load %arg2[%c57] : memref<81xf32, #tpu.memory_space<smem>>
    %275 = vector.broadcast %274 : f32 to vector<8x256xf32>
    %276 = arith.mulf %7, %275 : vector<8x256xf32>
    %277 = arith.addf %273, %276 : vector<8x256xf32>
    %c58 = arith.constant 58 : index
    %278 = memref.load %arg2[%c58] : memref<81xf32, #tpu.memory_space<smem>>
    %279 = vector.broadcast %278 : f32 to vector<8x256xf32>
    %280 = arith.mulf %9, %279 : vector<8x256xf32>
    %281 = arith.addf %277, %280 : vector<8x256xf32>
    %c59 = arith.constant 59 : index
    %282 = memref.load %arg2[%c59] : memref<81xf32, #tpu.memory_space<smem>>
    %283 = vector.broadcast %282 : f32 to vector<8x256xf32>
    %284 = arith.mulf %11, %283 : vector<8x256xf32>
    %285 = arith.addf %281, %284 : vector<8x256xf32>
    %c60 = arith.constant 60 : index
    %286 = memref.load %arg2[%c60] : memref<81xf32, #tpu.memory_space<smem>>
    %287 = vector.broadcast %286 : f32 to vector<8x256xf32>
    %288 = arith.mulf %13, %287 : vector<8x256xf32>
    %289 = arith.addf %285, %288 : vector<8x256xf32>
    %c61 = arith.constant 61 : index
    %290 = memref.load %arg2[%c61] : memref<81xf32, #tpu.memory_space<smem>>
    %291 = vector.broadcast %290 : f32 to vector<8x256xf32>
    %292 = arith.mulf %15, %291 : vector<8x256xf32>
    %293 = arith.addf %289, %292 : vector<8x256xf32>
    %c62 = arith.constant 62 : index
    %294 = memref.load %arg2[%c62] : memref<81xf32, #tpu.memory_space<smem>>
    %295 = vector.broadcast %294 : f32 to vector<8x256xf32>
    %296 = arith.mulf %17, %295 : vector<8x256xf32>
    %297 = arith.addf %293, %296 : vector<8x256xf32>
    %c6_33 = arith.constant 6 : index
    %298 = memref.load %arg3[%c6_33] : memref<9xf32, #tpu.memory_space<smem>>
    %299 = vector.broadcast %298 : f32 to vector<8x256xf32>
    %300 = arith.addf %297, %299 : vector<8x256xf32>
    %301 = math.tanh %300 : vector<8x256xf32>
    %302 = arith.mulf %5, %301 : vector<8x256xf32>
    %303 = arith.addf %262, %302 : vector<8x256xf32>
    %c63 = arith.constant 63 : index
    %304 = memref.load %arg2[%c63] : memref<81xf32, #tpu.memory_space<smem>>
    %305 = vector.broadcast %304 : f32 to vector<8x256xf32>
    %306 = arith.mulf %1, %305 : vector<8x256xf32>
    %c64 = arith.constant 64 : index
    %307 = memref.load %arg2[%c64] : memref<81xf32, #tpu.memory_space<smem>>
    %308 = vector.broadcast %307 : f32 to vector<8x256xf32>
    %309 = arith.mulf %3, %308 : vector<8x256xf32>
    %310 = arith.addf %306, %309 : vector<8x256xf32>
    %c65 = arith.constant 65 : index
    %311 = memref.load %arg2[%c65] : memref<81xf32, #tpu.memory_space<smem>>
    %312 = vector.broadcast %311 : f32 to vector<8x256xf32>
    %313 = arith.mulf %5, %312 : vector<8x256xf32>
    %314 = arith.addf %310, %313 : vector<8x256xf32>
    %c66 = arith.constant 66 : index
    %315 = memref.load %arg2[%c66] : memref<81xf32, #tpu.memory_space<smem>>
    %316 = vector.broadcast %315 : f32 to vector<8x256xf32>
    %317 = arith.mulf %7, %316 : vector<8x256xf32>
    %318 = arith.addf %314, %317 : vector<8x256xf32>
    %c67 = arith.constant 67 : index
    %319 = memref.load %arg2[%c67] : memref<81xf32, #tpu.memory_space<smem>>
    %320 = vector.broadcast %319 : f32 to vector<8x256xf32>
    %321 = arith.mulf %9, %320 : vector<8x256xf32>
    %322 = arith.addf %318, %321 : vector<8x256xf32>
    %c68 = arith.constant 68 : index
    %323 = memref.load %arg2[%c68] : memref<81xf32, #tpu.memory_space<smem>>
    %324 = vector.broadcast %323 : f32 to vector<8x256xf32>
    %325 = arith.mulf %11, %324 : vector<8x256xf32>
    %326 = arith.addf %322, %325 : vector<8x256xf32>
    %c69 = arith.constant 69 : index
    %327 = memref.load %arg2[%c69] : memref<81xf32, #tpu.memory_space<smem>>
    %328 = vector.broadcast %327 : f32 to vector<8x256xf32>
    %329 = arith.mulf %13, %328 : vector<8x256xf32>
    %330 = arith.addf %326, %329 : vector<8x256xf32>
    %c70 = arith.constant 70 : index
    %331 = memref.load %arg2[%c70] : memref<81xf32, #tpu.memory_space<smem>>
    %332 = vector.broadcast %331 : f32 to vector<8x256xf32>
    %333 = arith.mulf %15, %332 : vector<8x256xf32>
    %334 = arith.addf %330, %333 : vector<8x256xf32>
    %c71 = arith.constant 71 : index
    %335 = memref.load %arg2[%c71] : memref<81xf32, #tpu.memory_space<smem>>
    %336 = vector.broadcast %335 : f32 to vector<8x256xf32>
    %337 = arith.mulf %17, %336 : vector<8x256xf32>
    %338 = arith.addf %334, %337 : vector<8x256xf32>
    %c7_34 = arith.constant 7 : index
    %339 = memref.load %arg3[%c7_34] : memref<9xf32, #tpu.memory_space<smem>>
    %340 = vector.broadcast %339 : f32 to vector<8x256xf32>
    %341 = arith.addf %338, %340 : vector<8x256xf32>
    %342 = math.tanh %341 : vector<8x256xf32>
    %343 = arith.mulf %11, %342 : vector<8x256xf32>
    %344 = arith.addf %303, %343 : vector<8x256xf32>
    %c72 = arith.constant 72 : index
    %345 = memref.load %arg2[%c72] : memref<81xf32, #tpu.memory_space<smem>>
    %346 = vector.broadcast %345 : f32 to vector<8x256xf32>
    %347 = arith.mulf %1, %346 : vector<8x256xf32>
    %c73 = arith.constant 73 : index
    %348 = memref.load %arg2[%c73] : memref<81xf32, #tpu.memory_space<smem>>
    %349 = vector.broadcast %348 : f32 to vector<8x256xf32>
    %350 = arith.mulf %3, %349 : vector<8x256xf32>
    %351 = arith.addf %347, %350 : vector<8x256xf32>
    %c74 = arith.constant 74 : index
    %352 = memref.load %arg2[%c74] : memref<81xf32, #tpu.memory_space<smem>>
    %353 = vector.broadcast %352 : f32 to vector<8x256xf32>
    %354 = arith.mulf %5, %353 : vector<8x256xf32>
    %355 = arith.addf %351, %354 : vector<8x256xf32>
    %c75 = arith.constant 75 : index
    %356 = memref.load %arg2[%c75] : memref<81xf32, #tpu.memory_space<smem>>
    %357 = vector.broadcast %356 : f32 to vector<8x256xf32>
    %358 = arith.mulf %7, %357 : vector<8x256xf32>
    %359 = arith.addf %355, %358 : vector<8x256xf32>
    %c76 = arith.constant 76 : index
    %360 = memref.load %arg2[%c76] : memref<81xf32, #tpu.memory_space<smem>>
    %361 = vector.broadcast %360 : f32 to vector<8x256xf32>
    %362 = arith.mulf %9, %361 : vector<8x256xf32>
    %363 = arith.addf %359, %362 : vector<8x256xf32>
    %c77 = arith.constant 77 : index
    %364 = memref.load %arg2[%c77] : memref<81xf32, #tpu.memory_space<smem>>
    %365 = vector.broadcast %364 : f32 to vector<8x256xf32>
    %366 = arith.mulf %11, %365 : vector<8x256xf32>
    %367 = arith.addf %363, %366 : vector<8x256xf32>
    %c78 = arith.constant 78 : index
    %368 = memref.load %arg2[%c78] : memref<81xf32, #tpu.memory_space<smem>>
    %369 = vector.broadcast %368 : f32 to vector<8x256xf32>
    %370 = arith.mulf %13, %369 : vector<8x256xf32>
    %371 = arith.addf %367, %370 : vector<8x256xf32>
    %c79 = arith.constant 79 : index
    %372 = memref.load %arg2[%c79] : memref<81xf32, #tpu.memory_space<smem>>
    %373 = vector.broadcast %372 : f32 to vector<8x256xf32>
    %374 = arith.mulf %15, %373 : vector<8x256xf32>
    %375 = arith.addf %371, %374 : vector<8x256xf32>
    %c80 = arith.constant 80 : index
    %376 = memref.load %arg2[%c80] : memref<81xf32, #tpu.memory_space<smem>>
    %377 = vector.broadcast %376 : f32 to vector<8x256xf32>
    %378 = arith.mulf %17, %377 : vector<8x256xf32>
    %379 = arith.addf %375, %378 : vector<8x256xf32>
    %c8_35 = arith.constant 8 : index
    %380 = memref.load %arg3[%c8_35] : memref<9xf32, #tpu.memory_space<smem>>
    %381 = vector.broadcast %380 : f32 to vector<8x256xf32>
    %382 = arith.addf %379, %381 : vector<8x256xf32>
    %383 = math.tanh %382 : vector<8x256xf32>
    %384 = arith.mulf %17, %383 : vector<8x256xf32>
    %385 = arith.addf %344, %384 : vector<8x256xf32>
    %c0_36 = arith.constant 0 : index
    %c0_37 = arith.constant 0 : index
    %386 = vector.load %arg4[%c0_36, %c0_37] : memref<8x256xf32, #tpu.memory_space<vmem>>, vector<8x256xf32>
    tpu.vector_store %arg4[%c0_36, %c0_37], %385 {strides = array<i32>} : memref<8x256xf32, #tpu.memory_space<vmem>>, vector<8x256xf32>,
    return
  }
  func.func @transform_0(%arg0: i32) -> (i32, i32, i32) {
    %c0_i32 = arith.constant 0 : i32
    %c0_i32_0 = arith.constant 0 : i32
    %c0_i32_1 = arith.constant 0 : i32
    return %c0_i32, %arg0, %c0_i32_0 : i32, i32, i32
  }
  func.func @transform_1(%arg0: i32) -> i32 {
    %c0_i32 = arith.constant 0 : i32
    %c0_i32_0 = arith.constant 0 : i32
    return %c0_i32 : i32
  }
  func.func @transform_2(%arg0: i32) -> i32 {
    %c0_i32 = arith.constant 0 : i32
    %c0_i32_0 = arith.constant 0 : i32
    return %c0_i32 : i32
  }
  func.func @transform_3(%arg0: i32) -> (i32, i32) {
    %c0_i32 = arith.constant 0 : i32
    %c0_i32_0 = arith.constant 0 : i32
    return %arg0, %c0_i32 : i32, i32
  }
}

</mosaic_0001>

<llo_original>
// kernel: tpu_custom_call.1
$region0: #{tpu_custom_call.1}
  #allocation0 [shape = 'u32[]', space=smem, size = 0x4, offset = 0x4, fixed_abs, tag = 'smem constant byte address 0x4 - core index']
  #allocation1 [shape = 'u32[144,128]{1,0:T(1,128)}', space=vmem, size = 0x12000, scoped, tag = 'internal scratch']
  %s0 = inlined_call_operand.hbm [shape: f32[3,8,384], index: 0, kind: input, shape index: {}]
  %s1 = inlined_call_operand.vmem [shape: f32[81], index: 1, kind: input, shape index: {}]
  %s2 = inlined_call_operand.vmem [shape: f32[9], index: 2, kind: input, shape index: {}]
  %s3 = inlined_call_operand.hbm [shape: f32[8,256], index: 3, kind: output, shape index: {}]
  %s4 = sld [smem:[#allocation0]]
  $region34: #{tpu_custom_call.1} parent=0
    _
  %s6 = ssub.s32 1, %s4
  %s7 = scalar_select 0, %s6, %s4
  $region1: #{tpu_custom_call.1} parent=0
    #allocation2 [shape = 'u8[36864]{0}', space=vmem, size = 0x9000, scoped, tag = 'input window, operand 0, single buffered']
    #allocation3 [shape = 's32[1]{0}', space=sflag, size = 0x4, scoped, tag = 'scoped memory for tpu_custom_call.1']
    #allocation4 [shape = 's32[1]{0}', space=sflag, size = 0x4, scoped, tag = 'scoped memory for tpu_custom_call.1']
    #allocation5 [shape = 's32[1]{0}', space=sflag, size = 0x4, scoped, tag = 'scoped memory for tpu_custom_call.1']
    #allocation6 [shape = 'u8[512]{0}', space=smem, size = 0x200, scoped, tag = 'input window, operand 1, single buffered']
    #allocation7 [shape = 'u8[512]{0}', space=smem, size = 0x200, scoped, tag = 'input window, operand 2, single buffered']
    #allocation8 [shape = 's32[1]{0}', space=sflag, size = 0x4, scoped, tag = 'scoped memory for tpu_custom_call.1']
    #allocation9 [shape = 'u8[8192]{0}', space=vmem, size = 0x2000, scoped, tag = 'output window, operand 0, single buffered']
    %8 = vsyncpa [#allocation3], 0
    %9 = vsyncpa [#allocation5], 0
    %10 = vsyncpa [#allocation8], 0
    %11 = vsyncpa [#allocation4], 0
    // Predicated region
    $region2: #{tpu_custom_call.1} parent=1 // pred_check
      _
    $region3: #{tpu_custom_call.1} parent=1 // pred_check_branch
      %13 = sbr.rel (0) target = $region5
    $region4: #{tpu_custom_call.1} parent=1 // pred_region
      %s15 = ssub.s32 1152, 1152
      %16 = vsyncadd [#allocation3], %s15
      %s17 = sshll.u32 [#allocation2], 4
      %s18 = int_to_ptr.vmem [resolvable:$true] %s17
      %23 = dma.hbm_to_vmem [thread:$0]  %s0, 1152, %s18, [#allocation3], 384, 384, 24
    $region5: #{tpu_custom_call.1} parent=1 // pred_fallthru
      _
    // Predicated region
    $region6: #{tpu_custom_call.1} parent=1 // pred_check
      _
    $region7: #{tpu_custom_call.1} parent=1 // pred_check_branch
      %25 = sbr.rel (0) target = $region9
    $region8: #{tpu_custom_call.1} parent=1 // pred_region
      %s27 = ssub.s32 16, 16
      %28 = vsyncadd [#allocation5], %s27
      %s30 = sshll.u32 %s1, 4
      %s31 = int_to_ptr.vmem [resolvable:$true] %s30
      %33 = dma.vmem_to_smem %s31, 16, [#allocation6], [#allocation5]
    $region9: #{tpu_custom_call.1} parent=1 // pred_fallthru
      _
    // Predicated region
    $region10: #{tpu_custom_call.1} parent=1 // pred_check
      _
    $region11: #{tpu_custom_call.1} parent=1 // pred_check_branch
      %35 = sbr.rel (0) target = $region13
    $region12: #{tpu_custom_call.1} parent=1 // pred_region
      %s37 = ssub.s32 16, 16
      %38 = vsyncadd [#allocation8], %s37
      %s40 = sshll.u32 %s2, 4
      %s41 = int_to_ptr.vmem [resolvable:$true] %s40
      %43 = dma.vmem_to_smem %s41, 16, [#allocation7], [#allocation8]
    $region13: #{tpu_custom_call.1} parent=1 // pred_fallthru
      _
    // Predicated region
    $region14: #{tpu_custom_call.1} parent=1 // pred_check
      _
    $region15: #{tpu_custom_call.1} parent=1 // pred_check_branch
      %45 = sbr.rel (0) target = $region17
    $region16: #{tpu_custom_call.1} parent=1 // pred_region
      %46 = dma.done [#allocation3], 1152
    $region17: #{tpu_custom_call.1} parent=1 // pred_fallthru
      _
    // Predicated region
    $region18: #{tpu_custom_call.1} parent=1 // pred_check
      _
    $region19: #{tpu_custom_call.1} parent=1 // pred_check_branch
      %48 = sbr.rel (0) target = $region21
    $region20: #{tpu_custom_call.1} parent=1 // pred_region
      %49 = dma.done [#allocation5], 16
    $region21: #{tpu_custom_call.1} parent=1 // pred_fallthru
      _
    // Predicated region
    $region22: #{tpu_custom_call.1} parent=1 // pred_check
      _
    $region23: #{tpu_custom_call.1} parent=1 // pred_check_branch
      %51 = sbr.rel (0) target = $region25
    $region24: #{tpu_custom_call.1} parent=1 // pred_region
      %52 = dma.done [#allocation8], 16
    $region25: #{tpu_custom_call.1} parent=1 // pred_fallthru
      _
    %53 = sfence
    %v54 = vld [vmem:[#allocation2] sm:$0xff]
    %v55 = vld [vmem:[#allocation2 + $0x8] sm:$0xff]
    %s56 = scalar_lea.vmem [#allocation2], 24
    %v57 = vld [vmem:[%s56] sm:$0xff]
    %v58 = vld [vmem:[%s56 + $0x8] sm:$0xff]
    %s59 = scalar_lea.vmem [#allocation2], 48
    %v60 = vld [vmem:[%s59] sm:$0xff]
    %v61 = vld [vmem:[%s59 + $0x8] sm:$0xff]
    %v62 = vld [vmem:[#allocation2 + $0x10] sm:$0xff]
    %v63 = vld [vmem:[%s56 + $0x10] sm:$0xff]
    %v64 = vld [vmem:[%s59 + $0x10] sm:$0xff]
    %s65 = sld [smem:[#allocation6]]
    %v66 = vstv %s65
    %v67 = vmul.f32 %v54, %v66
    %v68 = vmul.f32 %v55, %v66
    %s69 = sld [smem:[#allocation6 + $0x1]]
    %v70 = vstv %s69
    %v71 = vmul.f32 %v57, %v70
    %v72 = vmul.f32 %v58, %v70
    %v73 = vadd.f32 %v67, %v71
    %v74 = vadd.f32 %v68, %v72
    %s75 = sld [smem:[#allocation6 + $0x2]]
    %v76 = vstv %s75
    %v77 = vmul.f32 %v60, %v76
    %v78 = vmul.f32 %v61, %v76
    %v79 = vadd.f32 %v73, %v77
    %v80 = vadd.f32 %v74, %v78
    %s81 = sld [smem:[#allocation6 + $0x3]]
    %v82 = vstv %s81
    %v83 = vmul.f32 %v54, %v82
    %v84 = vmul.f32 %v55, %v82
    %v85 = vmul.f32 %v62, %v82
    %89 = vrot.lane.b32.xlu0 %v83, 112
    %v90 = vpop.permute.xlu0 %89
    %91 = vrot.lane.b32.xlu0 %v84, 112
    %v92 = vpop.permute.xlu0 %91
    %93 = vrot.lane.b32.xlu0 %v85, 112
    %v94 = vpop.permute.xlu0 %93
    %vm95 = vcmask 916480
    %v96 = vsel %vm95, %v90, %v92
    %v97 = vsel %vm95, %v92, %v94
    %v100 = vadd.f32 %v79, %v96
    %v101 = vadd.f32 %v80, %v97
    %s102 = sld [smem:[#allocation6 + $0x4]]
    %v103 = vstv %s102
    %v104 = vmul.f32 %v57, %v103
    %v105 = vmul.f32 %v58, %v103
    %v106 = vmul.f32 %v63, %v103
    %110 = vrot.lane.b32.xlu0 %v104, 112
    %v111 = vpop.permute.xlu0 %110
    %112 = vrot.lane.b32.xlu0 %v105, 112
    %v113 = vpop.permute.xlu0 %112
    %114 = vrot.lane.b32.xlu0 %v106, 112
    %v115 = vpop.permute.xlu0 %114
    %v116 = vsel %vm95, %v111, %v113
    %v117 = vsel %vm95, %v113, %v115
    %v120 = vadd.f32 %v100, %v116
    %v121 = vadd.f32 %v101, %v117
    %s122 = sld [smem:[#allocation6 + $0x5]]
    %v123 = vstv %s122
    %v124 = vmul.f32 %v60, %v123
    %v125 = vmul.f32 %v61, %v123
    %v126 = vmul.f32 %v64, %v123
    %130 = vrot.lane.b32.xlu0 %v124, 112
    %v131 = vpop.permute.xlu0 %130
    %132 = vrot.lane.b32.xlu0 %v125, 112
    %v133 = vpop.permute.xlu0 %132
    %134 = vrot.lane.b32.xlu0 %v126, 112
    %v135 = vpop.permute.xlu0 %134
    %v136 = vsel %vm95, %v131, %v133
    %v137 = vsel %vm95, %v133, %v135
    %v140 = vadd.f32 %v120, %v136
    %v141 = vadd.f32 %v121, %v137
    %s142 = sld [smem:[#allocation6 + $0x6]]
    %v143 = vstv %s142
    %v144 = vmul.f32 %v54, %v143
    %v145 = vmul.f32 %v55, %v143
    %v146 = vmul.f32 %v62, %v143
    %150 = vrot.lane.b32.xlu0 %v144, 96
    %v151 = vpop.permute.xlu0 %150
    %152 = vrot.lane.b32.xlu0 %v145, 96
    %v153 = vpop.permute.xlu0 %152
    %154 = vrot.lane.b32.xlu0 %v146, 96
    %v155 = vpop.permute.xlu0 %154
    %vm156 = vcmask 785408
    %v157 = vsel %vm156, %v151, %v153
    %v158 = vsel %vm156, %v153, %v155
    %v161 = vadd.f32 %v140, %v157
    %v162 = vadd.f32 %v141, %v158
    %s163 = sld [smem:[#allocation6 + $0x7]]
    %v164 = vstv %s163
    %v165 = vmul.f32 %v57, %v164
    %v166 = vmul.f32 %v58, %v164
    %v167 = vmul.f32 %v63, %v164
    %171 = vrot.lane.b32.xlu0 %v165, 96
    %v172 = vpop.permute.xlu0 %171
    %173 = vrot.lane.b32.xlu0 %v166, 96
    %v174 = vpop.permute.xlu0 %173
    %175 = vrot.lane.b32.xlu0 %v167, 96
    %v176 = vpop.permute.xlu0 %175
    %v177 = vsel %vm156, %v172, %v174
    %v178 = vsel %vm156, %v174, %v176
    %v181 = vadd.f32 %v161, %v177
    %v182 = vadd.f32 %v162, %v178
    %s183 = sld [smem:[#allocation6 + $0x8]]
    %v184 = vstv %s183
    %v185 = vmul.f32 %v60, %v184
    %v186 = vmul.f32 %v61, %v184
    %v187 = vmul.f32 %v64, %v184
    %191 = vrot.lane.b32.xlu0 %v185, 96
    %v192 = vpop.permute.xlu0 %191
    %193 = vrot.lane.b32.xlu0 %v186, 96
    %v194 = vpop.permute.xlu0 %193
    %195 = vrot.lane.b32.xlu0 %v187, 96
    %v196 = vpop.permute.xlu0 %195
    %v197 = vsel %vm156, %v192, %v194
    %v198 = vsel %vm156, %v194, %v196
    %v201 = vadd.f32 %v181, %v197
    %v202 = vadd.f32 %v182, %v198
    %s203 = sld [smem:[#allocation7]]
    %v204 = vstv %s203
    %v205 = vadd.f32 %v201, %v204
    %v206 = vadd.f32 %v202, %v204
    %v207 = vtanh.pop %v205
    %v208 = vtanh.pop %v206
    %v209 = vmul.f32 %v54, %v207
    %v210 = vmul.f32 %v55, %v208
    %s211 = sld [smem:[#allocation6 + $0x9]]
    %v212 = vstv %s211
    %v213 = vmul.f32 %v54, %v212
    %v214 = vmul.f32 %v55, %v212
    %s215 = sld [smem:[#allocation6 + $0xa]]
    %v216 = vstv %s215
    %v217 = vmul.f32 %v57, %v216
    %v218 = vmul.f32 %v58, %v216
    %v219 = vadd.f32 %v213, %v217
    %v220 = vadd.f32 %v214, %v218
    %s221 = sld [smem:[#allocation6 + $0xb]]
    %v222 = vstv %s221
    %v223 = vmul.f32 %v60, %v222
    %v224 = vmul.f32 %v61, %v222
    %v225 = vadd.f32 %v219, %v223
    %v226 = vadd.f32 %v220, %v224
    %s227 = sld [smem:[#allocation6 + $0xc]]
    %v228 = vstv %s227
    %v229 = vmul.f32 %v54, %v228
    %v230 = vmul.f32 %v55, %v228
    %v231 = vmul.f32 %v62, %v228
    %235 = vrot.lane.b32.xlu0 %v229, 112
    %v236 = vpop.permute.xlu0 %235
    %237 = vrot.lane.b32.xlu0 %v230, 112
    %v238 = vpop.permute.xlu0 %237
    %239 = vrot.lane.b32.xlu0 %v231, 112
    %v240 = vpop.permute.xlu0 %239
    %v241 = vsel %vm95, %v236, %v238
    %v242 = vsel %vm95, %v238, %v240
    %v245 = vadd.f32 %v225, %v241
    %v246 = vadd.f32 %v226, %v242
    %s247 = sld [smem:[#allocation6 + $0xd]]
    %v248 = vstv %s247
    %v249 = vmul.f32 %v57, %v248
    %v250 = vmul.f32 %v58, %v248
    %v251 = vmul.f32 %v63, %v248
    %255 = vrot.lane.b32.xlu0 %v249, 112
    %v256 = vpop.permute.xlu0 %255
    %257 = vrot.lane.b32.xlu0 %v250, 112
    %v258 = vpop.permute.xlu0 %257
    %259 = vrot.lane.b32.xlu0 %v251, 112
    %v260 = vpop.permute.xlu0 %259
    %v261 = vsel %vm95, %v256, %v258
    %v262 = vsel %vm95, %v258, %v260
    %v265 = vadd.f32 %v245, %v261
    %v266 = vadd.f32 %v246, %v262
    %s267 = sld [smem:[#allocation6 + $0xe]]
    %v268 = vstv %s267
    %v269 = vmul.f32 %v60, %v268
    %v270 = vmul.f32 %v61, %v268
    %v271 = vmul.f32 %v64, %v268
    %275 = vrot.lane.b32.xlu0 %v269, 112
    %v276 = vpop.permute.xlu0 %275
    %277 = vrot.lane.b32.xlu0 %v270, 112
    %v278 = vpop.permute.xlu0 %277
    %279 = vrot.lane.b32.xlu0 %v271, 112
    %v280 = vpop.permute.xlu0 %279
    %v281 = vsel %vm95, %v276, %v278
    %v282 = vsel %vm95, %v278, %v280
    %v285 = vadd.f32 %v265, %v281
    %v286 = vadd.f32 %v266, %v282
    %s287 = sld [smem:[#allocation6 + $0xf]]
    %v288 = vstv %s287
    %v289 = vmul.f32 %v54, %v288
    %v290 = vmul.f32 %v55, %v288
    %v291 = vmul.f32 %v62, %v288
    %295 = vrot.lane.b32.xlu0 %v289, 96
    %v296 = vpop.permute.xlu0 %295
    %297 = vrot.lane.b32.xlu0 %v290, 96
    %v298 = vpop.permute.xlu0 %297
    %299 = vrot.lane.b32.xlu0 %v291, 96
    %v300 = vpop.permute.xlu0 %299
    %v301 = vsel %vm156, %v296, %v298
    %v302 = vsel %vm156, %v298, %v300
    %v305 = vadd.f32 %v285, %v301
    %v306 = vadd.f32 %v286, %v302
    %s307 = sld [smem:[#allocation6 + $0x10]]
    %v308 = vstv %s307
    %v309 = vmul.f32 %v57, %v308
    %v310 = vmul.f32 %v58, %v308
    %v311 = vmul.f32 %v63, %v308
    %315 = vrot.lane.b32.xlu0 %v309, 96
    %v316 = vpop.permute.xlu0 %315
    %317 = vrot.lane.b32.xlu0 %v310, 96
    %v318 = vpop.permute.xlu0 %317
    %319 = vrot.lane.b32.xlu0 %v311, 96
    %v320 = vpop.permute.xlu0 %319
    %v321 = vsel %vm156, %v316, %v318
    %v322 = vsel %vm156, %v318, %v320
    %v325 = vadd.f32 %v305, %v321
    %v326 = vadd.f32 %v306, %v322
    %s327 = sld [smem:[#allocation6 + $0x11]]
    %v328 = vstv %s327
    %v329 = vmul.f32 %v60, %v328
    %v330 = vmul.f32 %v61, %v328
    %v331 = vmul.f32 %v64, %v328
    %335 = vrot.lane.b32.xlu0 %v329, 96
    %v336 = vpop.permute.xlu0 %335
    %337 = vrot.lane.b32.xlu0 %v330, 96
    %v338 = vpop.permute.xlu0 %337
    %339 = vrot.lane.b32.xlu0 %v331, 96
    %v340 = vpop.permute.xlu0 %339
    %v341 = vsel %vm156, %v336, %v338
    %v342 = vsel %vm156, %v338, %v340
    %v345 = vadd.f32 %v325, %v341
    %v346 = vadd.f32 %v326, %v342
    %s347 = sld [smem:[#allocation7 + $0x1]]
    %v348 = vstv %s347
    %v349 = vadd.f32 %v345, %v348
    %v350 = vadd.f32 %v346, %v348
    %v351 = vtanh.pop %v349
    %v352 = vtanh.pop %v350
    %355 = vrot.lane.b32.xlu0 %v351, 16
    %v356 = vpop.permute.xlu0 %355
    %357 = vrot.lane.b32.xlu0 %v352, 16
    %v358 = vpop.permute.xlu0 %357
    %vm359 = vcmask 130048
    %v360 = vsel %vm359, %v356, %v358
    %v364 = vmul.f32 %v54, %v356
    %v365 = vmul.f32 %v55, %v360
    %v366 = vmul.f32 %v62, %v358
    %370 = vrot.lane.b32.xlu0 %v364, 112
    %v371 = vpop.permute.xlu0 %370
    %372 = vrot.lane.b32.xlu0 %v365, 112
    %v373 = vpop.permute.xlu0 %372
    %374 = vrot.lane.b32.xlu0 %v366, 112
    %v375 = vpop.permute.xlu0 %374
    %v376 = vsel %vm95, %v371, %v373
    %v377 = vsel %vm95, %v373, %v375
    %v380 = vadd.f32 %v209, %v376
    %v381 = vadd.f32 %v210, %v377
    %s382 = sld [smem:[#allocation6 + $0x12]]
    %v383 = vstv %s382
    %v384 = vmul.f32 %v54, %v383
    %v385 = vmul.f32 %v55, %v383
    %s386 = sld [smem:[#allocation6 + $0x13]]
    %v387 = vstv %s386
    %v388 = vmul.f32 %v57, %v387
    %v389 = vmul.f32 %v58, %v387
    %v390 = vadd.f32 %v384, %v388
    %v391 = vadd.f32 %v385, %v389
    %s392 = sld [smem:[#allocation6 + $0x14]]
    %v393 = vstv %s392
    %v394 = vmul.f32 %v60, %v393
    %v395 = vmul.f32 %v61, %v393
    %v396 = vadd.f32 %v390, %v394
    %v397 = vadd.f32 %v391, %v395
    %s398 = sld [smem:[#allocation6 + $0x15]]
    %v399 = vstv %s398
    %v400 = vmul.f32 %v54, %v399
    %v401 = vmul.f32 %v55, %v399
    %v402 = vmul.f32 %v62, %v399
    %406 = vrot.lane.b32.xlu0 %v400, 112
    %v407 = vpop.permute.xlu0 %406
    %408 = vrot.lane.b32.xlu0 %v401, 112
    %v409 = vpop.permute.xlu0 %408
    %410 = vrot.lane.b32.xlu0 %v402, 112
    %v411 = vpop.permute.xlu0 %410
    %v412 = vsel %vm95, %v407, %v409
    %v413 = vsel %vm95, %v409, %v411
    %v416 = vadd.f32 %v396, %v412
    %v417 = vadd.f32 %v397, %v413
    %s418 = sld [smem:[#allocation6 + $0x16]]
    %v419 = vstv %s418
    %v420 = vmul.f32 %v57, %v419
    %v421 = vmul.f32 %v58, %v419
    %v422 = vmul.f32 %v63, %v419
    %426 = vrot.lane.b32.xlu0 %v420, 112
    %v427 = vpop.permute.xlu0 %426
    %428 = vrot.lane.b32.xlu0 %v421, 112
    %v429 = vpop.permute.xlu0 %428
    %430 = vrot.lane.b32.xlu0 %v422, 112
    %v431 = vpop.permute.xlu0 %430
    %v432 = vsel %vm95, %v427, %v429
    %v433 = vsel %vm95, %v429, %v431
    %v436 = vadd.f32 %v416, %v432
    %v437 = vadd.f32 %v417, %v433
    %s438 = sld [smem:[#allocation6 + $0x17]]
    %v439 = vstv %s438
    %v440 = vmul.f32 %v60, %v439
    %v441 = vmul.f32 %v61, %v439
    %v442 = vmul.f32 %v64, %v439
    %446 = vrot.lane.b32.xlu0 %v440, 112
    %v447 = vpop.permute.xlu0 %446
    %448 = vrot.lane.b32.xlu0 %v441, 112
    %v449 = vpop.permute.xlu0 %448
    %450 = vrot.lane.b32.xlu0 %v442, 112
    %v451 = vpop.permute.xlu0 %450
    %v452 = vsel %vm95, %v447, %v449
    %v453 = vsel %vm95, %v449, %v451
    %v456 = vadd.f32 %v436, %v452
    %v457 = vadd.f32 %v437, %v453
    %s458 = sld [smem:[#allocation6 + $0x18]]
    %v459 = vstv %s458
    %v460 = vmul.f32 %v54, %v459
    %v461 = vmul.f32 %v55, %v459
    %v462 = vmul.f32 %v62, %v459
    %466 = vrot.lane.b32.xlu0 %v460, 96
    %v467 = vpop.permute.xlu0 %466
    %468 = vrot.lane.b32.xlu0 %v461, 96
    %v469 = vpop.permute.xlu0 %468
    %470 = vrot.lane.b32.xlu0 %v462, 96
    %v471 = vpop.permute.xlu0 %470
    %v472 = vsel %vm156, %v467, %v469
    %v473 = vsel %vm156, %v469, %v471
    %v476 = vadd.f32 %v456, %v472
    %v477 = vadd.f32 %v457, %v473
    %s478 = sld [smem:[#allocation6 + $0x19]]
    %v479 = vstv %s478
    %v480 = vmul.f32 %v57, %v479
    %v481 = vmul.f32 %v58, %v479
    %v482 = vmul.f32 %v63, %v479
    %486 = vrot.lane.b32.xlu0 %v480, 96
    %v487 = vpop.permute.xlu0 %486
    %488 = vrot.lane.b32.xlu0 %v481, 96
    %v489 = vpop.permute.xlu0 %488
    %490 = vrot.lane.b32.xlu0 %v482, 96
    %v491 = vpop.permute.xlu0 %490
    %v492 = vsel %vm156, %v487, %v489
    %v493 = vsel %vm156, %v489, %v491
    %v496 = vadd.f32 %v476, %v492
    %v497 = vadd.f32 %v477, %v493
    %s498 = sld [smem:[#allocation6 + $0x1a]]
    %v499 = vstv %s498
    %v500 = vmul.f32 %v60, %v499
    %v501 = vmul.f32 %v61, %v499
    %v502 = vmul.f32 %v64, %v499
    %506 = vrot.lane.b32.xlu0 %v500, 96
    %v507 = vpop.permute.xlu0 %506
    %508 = vrot.lane.b32.xlu0 %v501, 96
    %v509 = vpop.permute.xlu0 %508
    %510 = vrot.lane.b32.xlu0 %v502, 96
    %v511 = vpop.permute.xlu0 %510
    %v512 = vsel %vm156, %v507, %v509
    %v513 = vsel %vm156, %v509, %v511
    %v516 = vadd.f32 %v496, %v512
    %v517 = vadd.f32 %v497, %v513
    %s518 = sld [smem:[#allocation7 + $0x2]]
    %v519 = vstv %s518
    %v520 = vadd.f32 %v516, %v519
    %v521 = vadd.f32 %v517, %v519
    %v522 = vtanh.pop %v520
    %v523 = vtanh.pop %v521
    %526 = vrot.lane.b32.xlu0 %v522, 32
    %v527 = vpop.permute.xlu0 %526
    %528 = vrot.lane.b32.xlu0 %v523, 32
    %v529 = vpop.permute.xlu0 %528
    %vm530 = vcmask 261120
    %v531 = vsel %vm530, %v527, %v529
    %v535 = vmul.f32 %v54, %v527
    %v536 = vmul.f32 %v55, %v531
    %v537 = vmul.f32 %v62, %v529
    %541 = vrot.lane.b32.xlu0 %v535, 96
    %v542 = vpop.permute.xlu0 %541
    %543 = vrot.lane.b32.xlu0 %v536, 96
    %v544 = vpop.permute.xlu0 %543
    %545 = vrot.lane.b32.xlu0 %v537, 96
    %v546 = vpop.permute.xlu0 %545
    %v547 = vsel %vm156, %v542, %v544
    %v548 = vsel %vm156, %v544, %v546
    %v551 = vadd.f32 %v380, %v547
    %v552 = vadd.f32 %v381, %v548
    %s553 = sld [smem:[#allocation6 + $0x1b]]
    %v554 = vstv %s553
    %v555 = vmul.f32 %v54, %v554
    %v556 = vmul.f32 %v55, %v554
    %s557 = sld [smem:[#allocation6 + $0x1c]]
    %v558 = vstv %s557
    %v559 = vmul.f32 %v57, %v558
    %v560 = vmul.f32 %v58, %v558
    %v561 = vadd.f32 %v555, %v559
    %v562 = vadd.f32 %v556, %v560
    %s563 = sld [smem:[#allocation6 + $0x1d]]
    %v564 = vstv %s563
    %v565 = vmul.f32 %v60, %v564
    %v566 = vmul.f32 %v61, %v564
    %v567 = vadd.f32 %v561, %v565
    %v568 = vadd.f32 %v562, %v566
    %s569 = sld [smem:[#allocation6 + $0x1e]]
    %v570 = vstv %s569
    %v571 = vmul.f32 %v54, %v570
    %v572 = vmul.f32 %v55, %v570
    %v573 = vmul.f32 %v62, %v570
    %577 = vrot.lane.b32.xlu0 %v571, 112
    %v578 = vpop.permute.xlu0 %577
    %579 = vrot.lane.b32.xlu0 %v572, 112
    %v580 = vpop.permute.xlu0 %579
    %581 = vrot.lane.b32.xlu0 %v573, 112
    %v582 = vpop.permute.xlu0 %581
    %v583 = vsel %vm95, %v578, %v580
    %v584 = vsel %vm95, %v580, %v582
    %v587 = vadd.f32 %v567, %v583
    %v588 = vadd.f32 %v568, %v584
    %s589 = sld [smem:[#allocation6 + $0x1f]]
    %v590 = vstv %s589
    %v591 = vmul.f32 %v57, %v590
    %v592 = vmul.f32 %v58, %v590
    %v593 = vmul.f32 %v63, %v590
    %597 = vrot.lane.b32.xlu0 %v591, 112
    %v598 = vpop.permute.xlu0 %597
    %599 = vrot.lane.b32.xlu0 %v592, 112
    %v600 = vpop.permute.xlu0 %599
    %601 = vrot.lane.b32.xlu0 %v593, 112
    %v602 = vpop.permute.xlu0 %601
    %v603 = vsel %vm95, %v598, %v600
    %v604 = vsel %vm95, %v600, %v602
    %v607 = vadd.f32 %v587, %v603
    %v608 = vadd.f32 %v588, %v604
    %s609 = sld [smem:[#allocation6 + $0x20]]
    %v610 = vstv %s609
    %v611 = vmul.f32 %v60, %v610
    %v612 = vmul.f32 %v61, %v610
    %v613 = vmul.f32 %v64, %v610
    %617 = vrot.lane.b32.xlu0 %v611, 112
    %v618 = vpop.permute.xlu0 %617
    %619 = vrot.lane.b32.xlu0 %v612, 112
    %v620 = vpop.permute.xlu0 %619
    %621 = vrot.lane.b32.xlu0 %v613, 112
    %v622 = vpop.permute.xlu0 %621
    %v623 = vsel %vm95, %v618, %v620
    %v624 = vsel %vm95, %v620, %v622
    %v627 = vadd.f32 %v607, %v623
    %v628 = vadd.f32 %v608, %v624
    %s629 = sld [smem:[#allocation6 + $0x21]]
    %v630 = vstv %s629
    %v631 = vmul.f32 %v54, %v630
    %v632 = vmul.f32 %v55, %v630
    %v633 = vmul.f32 %v62, %v630
    %637 = vrot.lane.b32.xlu0 %v631, 96
    %v638 = vpop.permute.xlu0 %637
    %639 = vrot.lane.b32.xlu0 %v632, 96
    %v640 = vpop.permute.xlu0 %639
    %641 = vrot.lane.b32.xlu0 %v633, 96
    %v642 = vpop.permute.xlu0 %641
    %v643 = vsel %vm156, %v638, %v640
    %v644 = vsel %vm156, %v640, %v642
    %v647 = vadd.f32 %v627, %v643
    %v648 = vadd.f32 %v628, %v644
    %s649 = sld [smem:[#allocation6 + $0x22]]
    %v650 = vstv %s649
    %v651 = vmul.f32 %v57, %v650
    %v652 = vmul.f32 %v58, %v650
    %v653 = vmul.f32 %v63, %v650
    %657 = vrot.lane.b32.xlu0 %v651, 96
    %v658 = vpop.permute.xlu0 %657
    %659 = vrot.lane.b32.xlu0 %v652, 96
    %v660 = vpop.permute.xlu0 %659
    %661 = vrot.lane.b32.xlu0 %v653, 96
    %v662 = vpop.permute.xlu0 %661
    %v663 = vsel %vm156, %v658, %v660
    %v664 = vsel %vm156, %v660, %v662
    %v667 = vadd.f32 %v647, %v663
    %v668 = vadd.f32 %v648, %v664
    %s669 = sld [smem:[#allocation6 + $0x23]]
    %v670 = vstv %s669
    %v671 = vmul.f32 %v60, %v670
    %v672 = vmul.f32 %v61, %v670
    %v673 = vmul.f32 %v64, %v670
    %677 = vrot.lane.b32.xlu0 %v671, 96
    %v678 = vpop.permute.xlu0 %677
    %679 = vrot.lane.b32.xlu0 %v672, 96
    %v680 = vpop.permute.xlu0 %679
    %681 = vrot.lane.b32.xlu0 %v673, 96
    %v682 = vpop.permute.xlu0 %681
    %v683 = vsel %vm156, %v678, %v680
    %v684 = vsel %vm156, %v680, %v682
    %v687 = vadd.f32 %v667, %v683
    %v688 = vadd.f32 %v668, %v684
    %s689 = sld [smem:[#allocation7 + $0x3]]
    %v690 = vstv %s689
    %v691 = vadd.f32 %v687, %v690
    %v692 = vadd.f32 %v688, %v690
    %v693 = vtanh.pop %v691
    %v694 = vtanh.pop %v692
    %v695 = vmul.f32 %v57, %v693
    %v696 = vmul.f32 %v58, %v694
    %v697 = vadd.f32 %v551, %v695
    %v698 = vadd.f32 %v552, %v696
    %s699 = sld [smem:[#allocation6 + $0x24]]
    %v700 = vstv %s699
    %v701 = vmul.f32 %v54, %v700
    %v702 = vmul.f32 %v55, %v700
    %s703 = sld [smem:[#allocation6 + $0x25]]
    %v704 = vstv %s703
    %v705 = vmul.f32 %v57, %v704
    %v706 = vmul.f32 %v58, %v704
    %v707 = vadd.f32 %v701, %v705
    %v708 = vadd.f32 %v702, %v706
    %s709 = sld [smem:[#allocation6 + $0x26]]
    %v710 = vstv %s709
    %v711 = vmul.f32 %v60, %v710
    %v712 = vmul.f32 %v61, %v710
    %v713 = vadd.f32 %v707, %v711
    %v714 = vadd.f32 %v708, %v712
    %s715 = sld [smem:[#allocation6 + $0x27]]
    %v716 = vstv %s715
    %v717 = vmul.f32 %v54, %v716
    %v718 = vmul.f32 %v55, %v716
    %v719 = vmul.f32 %v62, %v716
    %723 = vrot.lane.b32.xlu0 %v717, 112
    %v724 = vpop.permute.xlu0 %723
    %725 = vrot.lane.b32.xlu0 %v718, 112
    %v726 = vpop.permute.xlu0 %725
    %727 = vrot.lane.b32.xlu0 %v719, 112
    %v728 = vpop.permute.xlu0 %727
    %v729 = vsel %vm95, %v724, %v726
    %v730 = vsel %vm95, %v726, %v728
    %v733 = vadd.f32 %v713, %v729
    %v734 = vadd.f32 %v714, %v730
    %s735 = sld [smem:[#allocation6 + $0x28]]
    %v736 = vstv %s735
    %v737 = vmul.f32 %v57, %v736
    %v738 = vmul.f32 %v58, %v736
    %v739 = vmul.f32 %v63, %v736
    %743 = vrot.lane.b32.xlu0 %v737, 112
    %v744 = vpop.permute.xlu0 %743
    %745 = vrot.lane.b32.xlu0 %v738, 112
    %v746 = vpop.permute.xlu0 %745
    %747 = vrot.lane.b32.xlu0 %v739, 112
    %v748 = vpop.permute.xlu0 %747
    %v749 = vsel %vm95, %v744, %v746
    %v750 = vsel %vm95, %v746, %v748
    %v753 = vadd.f32 %v733, %v749
    %v754 = vadd.f32 %v734, %v750
    %s755 = sld [smem:[#allocation6 + $0x29]]
    %v756 = vstv %s755
    %v757 = vmul.f32 %v60, %v756
    %v758 = vmul.f32 %v61, %v756
    %v759 = vmul.f32 %v64, %v756
    %763 = vrot.lane.b32.xlu0 %v757, 112
    %v764 = vpop.permute.xlu0 %763
    %765 = vrot.lane.b32.xlu0 %v758, 112
    %v766 = vpop.permute.xlu0 %765
    %767 = vrot.lane.b32.xlu0 %v759, 112
    %v768 = vpop.permute.xlu0 %767
    %v769 = vsel %vm95, %v764, %v766
    %v770 = vsel %vm95, %v766, %v768
    %v773 = vadd.f32 %v753, %v769
    %v774 = vadd.f32 %v754, %v770
    %s775 = sld [smem:[#allocation6 + $0x2a]]
    %v776 = vstv %s775
    %v777 = vmul.f32 %v54, %v776
    %v778 = vmul.f32 %v55, %v776
    %v779 = vmul.f32 %v62, %v776
    %783 = vrot.lane.b32.xlu0 %v777, 96
    %v784 = vpop.permute.xlu0 %783
    %785 = vrot.lane.b32.xlu0 %v778, 96
    %v786 = vpop.permute.xlu0 %785
    %787 = vrot.lane.b32.xlu0 %v779, 96
    %v788 = vpop.permute.xlu0 %787
    %v789 = vsel %vm156, %v784, %v786
    %v790 = vsel %vm156, %v786, %v788
    %v793 = vadd.f32 %v773, %v789
    %v794 = vadd.f32 %v774, %v790
    %s795 = sld [smem:[#allocation6 + $0x2b]]
    %v796 = vstv %s795
    %v797 = vmul.f32 %v57, %v796
    %v798 = vmul.f32 %v58, %v796
    %v799 = vmul.f32 %v63, %v796
    %803 = vrot.lane.b32.xlu0 %v797, 96
    %v804 = vpop.permute.xlu0 %803
    %805 = vrot.lane.b32.xlu0 %v798, 96
    %v806 = vpop.permute.xlu0 %805
    %807 = vrot.lane.b32.xlu0 %v799, 96
    %v808 = vpop.permute.xlu0 %807
    %v809 = vsel %vm156, %v804, %v806
    %v810 = vsel %vm156, %v806, %v808
    %v813 = vadd.f32 %v793, %v809
    %v814 = vadd.f32 %v794, %v810
    %s815 = sld [smem:[#allocation6 + $0x2c]]
    %v816 = vstv %s815
    %v817 = vmul.f32 %v60, %v816
    %v818 = vmul.f32 %v61, %v816
    %v819 = vmul.f32 %v64, %v816
    %823 = vrot.lane.b32.xlu0 %v817, 96
    %v824 = vpop.permute.xlu0 %823
    %825 = vrot.lane.b32.xlu0 %v818, 96
    %v826 = vpop.permute.xlu0 %825
    %827 = vrot.lane.b32.xlu0 %v819, 96
    %v828 = vpop.permute.xlu0 %827
    %v829 = vsel %vm156, %v824, %v826
    %v830 = vsel %vm156, %v826, %v828
    %v833 = vadd.f32 %v813, %v829
    %v834 = vadd.f32 %v814, %v830
    %s835 = sld [smem:[#allocation7 + $0x4]]
    %v836 = vstv %s835
    %v837 = vadd.f32 %v833, %v836
    %v838 = vadd.f32 %v834, %v836
    %v839 = vtanh.pop %v837
    %v840 = vtanh.pop %v838
    %843 = vrot.lane.b32.xlu0 %v839, 16
    %v844 = vpop.permute.xlu0 %843
    %845 = vrot.lane.b32.xlu0 %v840, 16
    %v846 = vpop.permute.xlu0 %845
    %v847 = vsel %vm359, %v844, %v846
    %v851 = vmul.f32 %v57, %v844
    %v852 = vmul.f32 %v58, %v847
    %v853 = vmul.f32 %v63, %v846
    %857 = vrot.lane.b32.xlu0 %v851, 112
    %v858 = vpop.permute.xlu0 %857
    %859 = vrot.lane.b32.xlu0 %v852, 112
    %v860 = vpop.permute.xlu0 %859
    %861 = vrot.lane.b32.xlu0 %v853, 112
    %v862 = vpop.permute.xlu0 %861
    %v863 = vsel %vm95, %v858, %v860
    %v864 = vsel %vm95, %v860, %v862
    %v867 = vadd.f32 %v697, %v863
    %v868 = vadd.f32 %v698, %v864
    %s869 = sld [smem:[#allocation6 + $0x2d]]
    %v870 = vstv %s869
    %v871 = vmul.f32 %v54, %v870
    %v872 = vmul.f32 %v55, %v870
    %s873 = sld [smem:[#allocation6 + $0x2e]]
    %v874 = vstv %s873
    %v875 = vmul.f32 %v57, %v874
    %v876 = vmul.f32 %v58, %v874
    %v877 = vadd.f32 %v871, %v875
    %v878 = vadd.f32 %v872, %v876
    %s879 = sld [smem:[#allocation6 + $0x2f]]
    %v880 = vstv %s879
    %v881 = vmul.f32 %v60, %v880
    %v882 = vmul.f32 %v61, %v880
    %v883 = vadd.f32 %v877, %v881
    %v884 = vadd.f32 %v878, %v882
    %s885 = sld [smem:[#allocation6 + $0x30]]
    %v886 = vstv %s885
    %v887 = vmul.f32 %v54, %v886
    %v888 = vmul.f32 %v55, %v886
    %v889 = vmul.f32 %v62, %v886
    %893 = vrot.lane.b32.xlu0 %v887, 112
    %v894 = vpop.permute.xlu0 %893
    %895 = vrot.lane.b32.xlu0 %v888, 112
    %v896 = vpop.permute.xlu0 %895
    %897 = vrot.lane.b32.xlu0 %v889, 112
    %v898 = vpop.permute.xlu0 %897
    %v899 = vsel %vm95, %v894, %v896
    %v900 = vsel %vm95, %v896, %v898
    %v903 = vadd.f32 %v883, %v899
    %v904 = vadd.f32 %v884, %v900
    %s905 = sld [smem:[#allocation6 + $0x31]]
    %v906 = vstv %s905
    %v907 = vmul.f32 %v57, %v906
    %v908 = vmul.f32 %v58, %v906
    %v909 = vmul.f32 %v63, %v906
    %913 = vrot.lane.b32.xlu0 %v907, 112
    %v914 = vpop.permute.xlu0 %913
    %915 = vrot.lane.b32.xlu0 %v908, 112
    %v916 = vpop.permute.xlu0 %915
    %917 = vrot.lane.b32.xlu0 %v909, 112
    %v918 = vpop.permute.xlu0 %917
    %v919 = vsel %vm95, %v914, %v916
    %v920 = vsel %vm95, %v916, %v918
    %v923 = vadd.f32 %v903, %v919
    %v924 = vadd.f32 %v904, %v920
    %s925 = sld [smem:[#allocation6 + $0x32]]
    %v926 = vstv %s925
    %v927 = vmul.f32 %v60, %v926
    %v928 = vmul.f32 %v61, %v926
    %v929 = vmul.f32 %v64, %v926
    %933 = vrot.lane.b32.xlu0 %v927, 112
    %v934 = vpop.permute.xlu0 %933
    %935 = vrot.lane.b32.xlu0 %v928, 112
    %v936 = vpop.permute.xlu0 %935
    %937 = vrot.lane.b32.xlu0 %v929, 112
    %v938 = vpop.permute.xlu0 %937
    %v939 = vsel %vm95, %v934, %v936
    %v940 = vsel %vm95, %v936, %v938
    %v943 = vadd.f32 %v923, %v939
    %v944 = vadd.f32 %v924, %v940
    %s945 = sld [smem:[#allocation6 + $0x33]]
    %v946 = vstv %s945
    %v947 = vmul.f32 %v54, %v946
    %v948 = vmul.f32 %v55, %v946
    %v949 = vmul.f32 %v62, %v946
    %953 = vrot.lane.b32.xlu0 %v947, 96
    %v954 = vpop.permute.xlu0 %953
    %955 = vrot.lane.b32.xlu0 %v948, 96
    %v956 = vpop.permute.xlu0 %955
    %957 = vrot.lane.b32.xlu0 %v949, 96
    %v958 = vpop.permute.xlu0 %957
    %v959 = vsel %vm156, %v954, %v956
    %v960 = vsel %vm156, %v956, %v958
    %v963 = vadd.f32 %v943, %v959
    %v964 = vadd.f32 %v944, %v960
    %s965 = sld [smem:[#allocation6 + $0x34]]
    %v966 = vstv %s965
    %v967 = vmul.f32 %v57, %v966
    %v968 = vmul.f32 %v58, %v966
    %v969 = vmul.f32 %v63, %v966
    %973 = vrot.lane.b32.xlu0 %v967, 96
    %v974 = vpop.permute.xlu0 %973
    %975 = vrot.lane.b32.xlu0 %v968, 96
    %v976 = vpop.permute.xlu0 %975
    %977 = vrot.lane.b32.xlu0 %v969, 96
    %v978 = vpop.permute.xlu0 %977
    %v979 = vsel %vm156, %v974, %v976
    %v980 = vsel %vm156, %v976, %v978
    %v983 = vadd.f32 %v963, %v979
    %v984 = vadd.f32 %v964, %v980
    %s985 = sld [smem:[#allocation6 + $0x35]]
    %v986 = vstv %s985
    %v987 = vmul.f32 %v60, %v986
    %v988 = vmul.f32 %v61, %v986
    %v989 = vmul.f32 %v64, %v986
    %993 = vrot.lane.b32.xlu0 %v987, 96
    %v994 = vpop.permute.xlu0 %993
    %995 = vrot.lane.b32.xlu0 %v988, 96
    %v996 = vpop.permute.xlu0 %995
    %997 = vrot.lane.b32.xlu0 %v989, 96
    %v998 = vpop.permute.xlu0 %997
    %v999 = vsel %vm156, %v994, %v996
    %v1000 = vsel %vm156, %v996, %v998
    %v1003 = vadd.f32 %v983, %v999
    %v1004 = vadd.f32 %v984, %v1000
    %s1005 = sld [smem:[#allocation7 + $0x5]]
    %v1006 = vstv %s1005
    %v1007 = vadd.f32 %v1003, %v1006
    %v1008 = vadd.f32 %v1004, %v1006
    %v1009 = vtanh.pop %v1007
    %v1010 = vtanh.pop %v1008
    %1013 = vrot.lane.b32.xlu0 %v1009, 32
    %v1014 = vpop.permute.xlu0 %1013
    %1015 = vrot.lane.b32.xlu0 %v1010, 32
    %v1016 = vpop.permute.xlu0 %1015
    %v1017 = vsel %vm530, %v1014, %v1016
    %v1021 = vmul.f32 %v57, %v1014
    %v1022 = vmul.f32 %v58, %v1017
    %v1023 = vmul.f32 %v63, %v1016
    %1027 = vrot.lane.b32.xlu0 %v1021, 96
    %v1028 = vpop.permute.xlu0 %1027
    %1029 = vrot.lane.b32.xlu0 %v1022, 96
    %v1030 = vpop.permute.xlu0 %1029
    %1031 = vrot.lane.b32.xlu0 %v1023, 96
    %v1032 = vpop.permute.xlu0 %1031
    %v1033 = vsel %vm156, %v1028, %v1030
    %v1034 = vsel %vm156, %v1030, %v1032
    %v1037 = vadd.f32 %v867, %v1033
    %v1038 = vadd.f32 %v868, %v1034
    %s1039 = sld [smem:[#allocation6 + $0x36]]
    %v1040 = vstv %s1039
    %v1041 = vmul.f32 %v54, %v1040
    %v1042 = vmul.f32 %v55, %v1040
    %s1043 = sld [smem:[#allocation6 + $0x37]]
    %v1044 = vstv %s1043
    %v1045 = vmul.f32 %v57, %v1044
    %v1046 = vmul.f32 %v58, %v1044
    %v1047 = vadd.f32 %v1041, %v1045
    %v1048 = vadd.f32 %v1042, %v1046
    %s1049 = sld [smem:[#allocation6 + $0x38]]
    %v1050 = vstv %s1049
    %v1051 = vmul.f32 %v60, %v1050
    %v1052 = vmul.f32 %v61, %v1050
    %v1053 = vadd.f32 %v1047, %v1051
    %v1054 = vadd.f32 %v1048, %v1052
    %s1055 = sld [smem:[#allocation6 + $0x39]]
    %v1056 = vstv %s1055
    %v1057 = vmul.f32 %v54, %v1056
    %v1058 = vmul.f32 %v55, %v1056
    %v1059 = vmul.f32 %v62, %v1056
    %1063 = vrot.lane.b32.xlu0 %v1057, 112
    %v1064 = vpop.permute.xlu0 %1063
    %1065 = vrot.lane.b32.xlu0 %v1058, 112
    %v1066 = vpop.permute.xlu0 %1065
    %1067 = vrot.lane.b32.xlu0 %v1059, 112
    %v1068 = vpop.permute.xlu0 %1067
    %v1069 = vsel %vm95, %v1064, %v1066
    %v1070 = vsel %vm95, %v1066, %v1068
    %v1073 = vadd.f32 %v1053, %v1069
    %v1074 = vadd.f32 %v1054, %v1070
    %s1075 = sld [smem:[#allocation6 + $0x3a]]
    %v1076 = vstv %s1075
    %v1077 = vmul.f32 %v57, %v1076
    %v1078 = vmul.f32 %v58, %v1076
    %v1079 = vmul.f32 %v63, %v1076
    %1083 = vrot.lane.b32.xlu0 %v1077, 112
    %v1084 = vpop.permute.xlu0 %1083
    %1085 = vrot.lane.b32.xlu0 %v1078, 112
    %v1086 = vpop.permute.xlu0 %1085
    %1087 = vrot.lane.b32.xlu0 %v1079, 112
    %v1088 = vpop.permute.xlu0 %1087
    %v1089 = vsel %vm95, %v1084, %v1086
    %v1090 = vsel %vm95, %v1086, %v1088
    %v1093 = vadd.f32 %v1073, %v1089
    %v1094 = vadd.f32 %v1074, %v1090
    %s1095 = sld [smem:[#allocation6 + $0x3b]]
    %v1096 = vstv %s1095
    %v1097 = vmul.f32 %v60, %v1096
    %v1098 = vmul.f32 %v61, %v1096
    %v1099 = vmul.f32 %v64, %v1096
    %1103 = vrot.lane.b32.xlu0 %v1097, 112
    %v1104 = vpop.permute.xlu0 %1103
    %1105 = vrot.lane.b32.xlu0 %v1098, 112
    %v1106 = vpop.permute.xlu0 %1105
    %1107 = vrot.lane.b32.xlu0 %v1099, 112
    %v1108 = vpop.permute.xlu0 %1107
    %v1109 = vsel %vm95, %v1104, %v1106
    %v1110 = vsel %vm95, %v1106, %v1108
    %v1113 = vadd.f32 %v1093, %v1109
    %v1114 = vadd.f32 %v1094, %v1110
    %s1115 = sld [smem:[#allocation6 + $0x3c]]
    %v1116 = vstv %s1115
    %v1117 = vmul.f32 %v54, %v1116
    %v1118 = vmul.f32 %v55, %v1116
    %v1119 = vmul.f32 %v62, %v1116
    %1123 = vrot.lane.b32.xlu0 %v1117, 96
    %v1124 = vpop.permute.xlu0 %1123
    %1125 = vrot.lane.b32.xlu0 %v1118, 96
    %v1126 = vpop.permute.xlu0 %1125
    %1127 = vrot.lane.b32.xlu0 %v1119, 96
    %v1128 = vpop.permute.xlu0 %1127
    %v1129 = vsel %vm156, %v1124, %v1126
    %v1130 = vsel %vm156, %v1126, %v1128
    %v1133 = vadd.f32 %v1113, %v1129
    %v1134 = vadd.f32 %v1114, %v1130
    %s1135 = sld [smem:[#allocation6 + $0x3d]]
    %v1136 = vstv %s1135
    %v1137 = vmul.f32 %v57, %v1136
    %v1138 = vmul.f32 %v58, %v1136
    %v1139 = vmul.f32 %v63, %v1136
    %1143 = vrot.lane.b32.xlu0 %v1137, 96
    %v1144 = vpop.permute.xlu0 %1143
    %1145 = vrot.lane.b32.xlu0 %v1138, 96
    %v1146 = vpop.permute.xlu0 %1145
    %1147 = vrot.lane.b32.xlu0 %v1139, 96
    %v1148 = vpop.permute.xlu0 %1147
    %v1149 = vsel %vm156, %v1144, %v1146
    %v1150 = vsel %vm156, %v1146, %v1148
    %v1153 = vadd.f32 %v1133, %v1149
    %v1154 = vadd.f32 %v1134, %v1150
    %s1155 = sld [smem:[#allocation6 + $0x3e]]
    %v1156 = vstv %s1155
    %v1157 = vmul.f32 %v60, %v1156
    %v1158 = vmul.f32 %v61, %v1156
    %v1159 = vmul.f32 %v64, %v1156
    %1163 = vrot.lane.b32.xlu0 %v1157, 96
    %v1164 = vpop.permute.xlu0 %1163
    %1165 = vrot.lane.b32.xlu0 %v1158, 96
    %v1166 = vpop.permute.xlu0 %1165
    %1167 = vrot.lane.b32.xlu0 %v1159, 96
    %v1168 = vpop.permute.xlu0 %1167
    %v1169 = vsel %vm156, %v1164, %v1166
    %v1170 = vsel %vm156, %v1166, %v1168
    %v1173 = vadd.f32 %v1153, %v1169
    %v1174 = vadd.f32 %v1154, %v1170
    %s1175 = sld [smem:[#allocation7 + $0x6]]
    %v1176 = vstv %s1175
    %v1177 = vadd.f32 %v1173, %v1176
    %v1178 = vadd.f32 %v1174, %v1176
    %v1179 = vtanh.pop %v1177
    %v1180 = vtanh.pop %v1178
    %v1181 = vmul.f32 %v60, %v1179
    %v1182 = vmul.f32 %v61, %v1180
    %v1183 = vadd.f32 %v1037, %v1181
    %v1184 = vadd.f32 %v1038, %v1182
    %s1185 = sld [smem:[#allocation6 + $0x3f]]
    %v1186 = vstv %s1185
    %v1187 = vmul.f32 %v54, %v1186
    %v1188 = vmul.f32 %v55, %v1186
    %s1189 = sld [smem:[#allocation6 + $0x40]]
    %v1190 = vstv %s1189
    %v1191 = vmul.f32 %v57, %v1190
    %v1192 = vmul.f32 %v58, %v1190
    %v1193 = vadd.f32 %v1187, %v1191
    %v1194 = vadd.f32 %v1188, %v1192
    %s1195 = sld [smem:[#allocation6 + $0x41]]
    %v1196 = vstv %s1195
    %v1197 = vmul.f32 %v60, %v1196
    %v1198 = vmul.f32 %v61, %v1196
    %v1199 = vadd.f32 %v1193, %v1197
    %v1200 = vadd.f32 %v1194, %v1198
    %s1201 = sld [smem:[#allocation6 + $0x42]]
    %v1202 = vstv %s1201
    %v1203 = vmul.f32 %v54, %v1202
    %v1204 = vmul.f32 %v55, %v1202
    %v1205 = vmul.f32 %v62, %v1202
    %1209 = vrot.lane.b32.xlu0 %v1203, 112
    %v1210 = vpop.permute.xlu0 %1209
    %1211 = vrot.lane.b32.xlu0 %v1204, 112
    %v1212 = vpop.permute.xlu0 %1211
    %1213 = vrot.lane.b32.xlu0 %v1205, 112
    %v1214 = vpop.permute.xlu0 %1213
    %v1215 = vsel %vm95, %v1210, %v1212
    %v1216 = vsel %vm95, %v1212, %v1214
    %v1219 = vadd.f32 %v1199, %v1215
    %v1220 = vadd.f32 %v1200, %v1216
    %s1221 = sld [smem:[#allocation6 + $0x43]]
    %v1222 = vstv %s1221
    %v1223 = vmul.f32 %v57, %v1222
    %v1224 = vmul.f32 %v58, %v1222
    %v1225 = vmul.f32 %v63, %v1222
    %1229 = vrot.lane.b32.xlu0 %v1223, 112
    %v1230 = vpop.permute.xlu0 %1229
    %1231 = vrot.lane.b32.xlu0 %v1224, 112
    %v1232 = vpop.permute.xlu0 %1231
    %1233 = vrot.lane.b32.xlu0 %v1225, 112
    %v1234 = vpop.permute.xlu0 %1233
    %v1235 = vsel %vm95, %v1230, %v1232
    %v1236 = vsel %vm95, %v1232, %v1234
    %v1239 = vadd.f32 %v1219, %v1235
    %v1240 = vadd.f32 %v1220, %v1236
    %s1241 = sld [smem:[#allocation6 + $0x44]]
    %v1242 = vstv %s1241
    %v1243 = vmul.f32 %v60, %v1242
    %v1244 = vmul.f32 %v61, %v1242
    %v1245 = vmul.f32 %v64, %v1242
    %1249 = vrot.lane.b32.xlu0 %v1243, 112
    %v1250 = vpop.permute.xlu0 %1249
    %1251 = vrot.lane.b32.xlu0 %v1244, 112
    %v1252 = vpop.permute.xlu0 %1251
    %1253 = vrot.lane.b32.xlu0 %v1245, 112
    %v1254 = vpop.permute.xlu0 %1253
    %v1255 = vsel %vm95, %v1250, %v1252
    %v1256 = vsel %vm95, %v1252, %v1254
    %v1259 = vadd.f32 %v1239, %v1255
    %v1260 = vadd.f32 %v1240, %v1256
    %s1261 = sld [smem:[#allocation6 + $0x45]]
    %v1262 = vstv %s1261
    %v1263 = vmul.f32 %v54, %v1262
    %v1264 = vmul.f32 %v55, %v1262
    %v1265 = vmul.f32 %v62, %v1262
    %1269 = vrot.lane.b32.xlu0 %v1263, 96
    %v1270 = vpop.permute.xlu0 %1269
    %1271 = vrot.lane.b32.xlu0 %v1264, 96
    %v1272 = vpop.permute.xlu0 %1271
    %1273 = vrot.lane.b32.xlu0 %v1265, 96
    %v1274 = vpop.permute.xlu0 %1273
    %v1275 = vsel %vm156, %v1270, %v1272
    %v1276 = vsel %vm156, %v1272, %v1274
    %v1279 = vadd.f32 %v1259, %v1275
    %v1280 = vadd.f32 %v1260, %v1276
    %s1281 = sld [smem:[#allocation6 + $0x46]]
    %v1282 = vstv %s1281
    %v1283 = vmul.f32 %v57, %v1282
    %v1284 = vmul.f32 %v58, %v1282
    %v1285 = vmul.f32 %v63, %v1282
    %1289 = vrot.lane.b32.xlu0 %v1283, 96
    %v1290 = vpop.permute.xlu0 %1289
    %1291 = vrot.lane.b32.xlu0 %v1284, 96
    %v1292 = vpop.permute.xlu0 %1291
    %1293 = vrot.lane.b32.xlu0 %v1285, 96
    %v1294 = vpop.permute.xlu0 %1293
    %v1295 = vsel %vm156, %v1290, %v1292
    %v1296 = vsel %vm156, %v1292, %v1294
    %v1299 = vadd.f32 %v1279, %v1295
    %v1300 = vadd.f32 %v1280, %v1296
    %s1301 = sld [smem:[#allocation6 + $0x47]]
    %v1302 = vstv %s1301
    %v1303 = vmul.f32 %v60, %v1302
    %v1304 = vmul.f32 %v61, %v1302
    %v1305 = vmul.f32 %v64, %v1302
    %1309 = vrot.lane.b32.xlu0 %v1303, 96
    %v1310 = vpop.permute.xlu0 %1309
    %1311 = vrot.lane.b32.xlu0 %v1304, 96
    %v1312 = vpop.permute.xlu0 %1311
    %1313 = vrot.lane.b32.xlu0 %v1305, 96
    %v1314 = vpop.permute.xlu0 %1313
    %v1315 = vsel %vm156, %v1310, %v1312
    %v1316 = vsel %vm156, %v1312, %v1314
    %v1319 = vadd.f32 %v1299, %v1315
    %v1320 = vadd.f32 %v1300, %v1316
    %s1321 = sld [smem:[#allocation7 + $0x7]]
    %v1322 = vstv %s1321
    %v1323 = vadd.f32 %v1319, %v1322
    %v1324 = vadd.f32 %v1320, %v1322
    %v1325 = vtanh.pop %v1323
    %v1326 = vtanh.pop %v1324
    %1329 = vrot.lane.b32.xlu0 %v1325, 16
    %v1330 = vpop.permute.xlu0 %1329
    %1331 = vrot.lane.b32.xlu0 %v1326, 16
    %v1332 = vpop.permute.xlu0 %1331
    %v1333 = vsel %vm359, %v1330, %v1332
    %v1337 = vmul.f32 %v60, %v1330
    %v1338 = vmul.f32 %v61, %v1333
    %v1339 = vmul.f32 %v64, %v1332
    %1343 = vrot.lane.b32.xlu0 %v1337, 112
    %v1344 = vpop.permute.xlu0 %1343
    %1345 = vrot.lane.b32.xlu0 %v1338, 112
    %v1346 = vpop.permute.xlu0 %1345
    %1347 = vrot.lane.b32.xlu0 %v1339, 112
    %v1348 = vpop.permute.xlu0 %1347
    %v1349 = vsel %vm95, %v1344, %v1346
    %v1350 = vsel %vm95, %v1346, %v1348
    %v1353 = vadd.f32 %v1183, %v1349
    %v1354 = vadd.f32 %v1184, %v1350
    %s1355 = sld [smem:[#allocation6 + $0x48]]
    %v1356 = vstv %s1355
    %v1357 = vmul.f32 %v54, %v1356
    %v1358 = vmul.f32 %v55, %v1356
    %s1359 = sld [smem:[#allocation6 + $0x49]]
    %v1360 = vstv %s1359
    %v1361 = vmul.f32 %v57, %v1360
    %v1362 = vmul.f32 %v58, %v1360
    %v1363 = vadd.f32 %v1357, %v1361
    %v1364 = vadd.f32 %v1358, %v1362
    %s1365 = sld [smem:[#allocation6 + $0x4a]]
    %v1366 = vstv %s1365
    %v1367 = vmul.f32 %v60, %v1366
    %v1368 = vmul.f32 %v61, %v1366
    %v1369 = vadd.f32 %v1363, %v1367
    %v1370 = vadd.f32 %v1364, %v1368
    %s1371 = sld [smem:[#allocation6 + $0x4b]]
    %v1372 = vstv %s1371
    %v1373 = vmul.f32 %v54, %v1372
    %v1374 = vmul.f32 %v55, %v1372
    %v1375 = vmul.f32 %v62, %v1372
    %1379 = vrot.lane.b32.xlu0 %v1373, 112
    %v1380 = vpop.permute.xlu0 %1379
    %1381 = vrot.lane.b32.xlu0 %v1374, 112
    %v1382 = vpop.permute.xlu0 %1381
    %1383 = vrot.lane.b32.xlu0 %v1375, 112
    %v1384 = vpop.permute.xlu0 %1383
    %v1385 = vsel %vm95, %v1380, %v1382
    %v1386 = vsel %vm95, %v1382, %v1384
    %v1389 = vadd.f32 %v1369, %v1385
    %v1390 = vadd.f32 %v1370, %v1386
    %s1391 = sld [smem:[#allocation6 + $0x4c]]
    %v1392 = vstv %s1391
    %v1393 = vmul.f32 %v57, %v1392
    %v1394 = vmul.f32 %v58, %v1392
    %v1395 = vmul.f32 %v63, %v1392
    %1399 = vrot.lane.b32.xlu0 %v1393, 112
    %v1400 = vpop.permute.xlu0 %1399
    %1401 = vrot.lane.b32.xlu0 %v1394, 112
    %v1402 = vpop.permute.xlu0 %1401
    %1403 = vrot.lane.b32.xlu0 %v1395, 112
    %v1404 = vpop.permute.xlu0 %1403
    %v1405 = vsel %vm95, %v1400, %v1402
    %v1406 = vsel %vm95, %v1402, %v1404
    %v1409 = vadd.f32 %v1389, %v1405
    %v1410 = vadd.f32 %v1390, %v1406
    %s1411 = sld [smem:[#allocation6 + $0x4d]]
    %v1412 = vstv %s1411
    %v1413 = vmul.f32 %v60, %v1412
    %v1414 = vmul.f32 %v61, %v1412
    %v1415 = vmul.f32 %v64, %v1412
    %1419 = vrot.lane.b32.xlu0 %v1413, 112
    %v1420 = vpop.permute.xlu0 %1419
    %1421 = vrot.lane.b32.xlu0 %v1414, 112
    %v1422 = vpop.permute.xlu0 %1421
    %1423 = vrot.lane.b32.xlu0 %v1415, 112
    %v1424 = vpop.permute.xlu0 %1423
    %v1425 = vsel %vm95, %v1420, %v1422
    %v1426 = vsel %vm95, %v1422, %v1424
    %v1429 = vadd.f32 %v1409, %v1425
    %v1430 = vadd.f32 %v1410, %v1426
    %s1431 = sld [smem:[#allocation6 + $0x4e]]
    %v1432 = vstv %s1431
    %v1433 = vmul.f32 %v54, %v1432
    %v1434 = vmul.f32 %v55, %v1432
    %v1435 = vmul.f32 %v62, %v1432
    %1439 = vrot.lane.b32.xlu0 %v1433, 96
    %v1440 = vpop.permute.xlu0 %1439
    %1441 = vrot.lane.b32.xlu0 %v1434, 96
    %v1442 = vpop.permute.xlu0 %1441
    %1443 = vrot.lane.b32.xlu0 %v1435, 96
    %v1444 = vpop.permute.xlu0 %1443
    %v1445 = vsel %vm156, %v1440, %v1442
    %v1446 = vsel %vm156, %v1442, %v1444
    %v1449 = vadd.f32 %v1429, %v1445
    %v1450 = vadd.f32 %v1430, %v1446
    %s1451 = sld [smem:[#allocation6 + $0x4f]]
    %v1452 = vstv %s1451
    %v1453 = vmul.f32 %v57, %v1452
    %v1454 = vmul.f32 %v58, %v1452
    %v1455 = vmul.f32 %v63, %v1452
    %1459 = vrot.lane.b32.xlu0 %v1453, 96
    %v1460 = vpop.permute.xlu0 %1459
    %1461 = vrot.lane.b32.xlu0 %v1454, 96
    %v1462 = vpop.permute.xlu0 %1461
    %1463 = vrot.lane.b32.xlu0 %v1455, 96
    %v1464 = vpop.permute.xlu0 %1463
    %v1465 = vsel %vm156, %v1460, %v1462
    %v1466 = vsel %vm156, %v1462, %v1464
    %v1469 = vadd.f32 %v1449, %v1465
    %v1470 = vadd.f32 %v1450, %v1466
    %s1471 = sld [smem:[#allocation6 + $0x50]]
    %v1472 = vstv %s1471
    %v1473 = vmul.f32 %v60, %v1472
    %v1474 = vmul.f32 %v61, %v1472
    %v1475 = vmul.f32 %v64, %v1472
    %1479 = vrot.lane.b32.xlu0 %v1473, 96
    %v1480 = vpop.permute.xlu0 %1479
    %1481 = vrot.lane.b32.xlu0 %v1474, 96
    %v1482 = vpop.permute.xlu0 %1481
    %1483 = vrot.lane.b32.xlu0 %v1475, 96
    %v1484 = vpop.permute.xlu0 %1483
    %v1485 = vsel %vm156, %v1480, %v1482
    %v1486 = vsel %vm156, %v1482, %v1484
    %v1489 = vadd.f32 %v1469, %v1485
    %v1490 = vadd.f32 %v1470, %v1486
    %s1491 = sld [smem:[#allocation7 + $0x8]]
    %v1492 = vstv %s1491
    %v1493 = vadd.f32 %v1489, %v1492
    %v1494 = vadd.f32 %v1490, %v1492
    %v1495 = vtanh.pop %v1493
    %v1496 = vtanh.pop %v1494
    %1499 = vrot.lane.b32.xlu0 %v1495, 32
    %v1500 = vpop.permute.xlu0 %1499
    %1501 = vrot.lane.b32.xlu0 %v1496, 32
    %v1502 = vpop.permute.xlu0 %1501
    %v1503 = vsel %vm530, %v1500, %v1502
    %v1507 = vmul.f32 %v60, %v1500
    %v1508 = vmul.f32 %v61, %v1503
    %v1509 = vmul.f32 %v64, %v1502
    %1513 = vrot.lane.b32.xlu0 %v1507, 96
    %v1514 = vpop.permute.xlu0 %1513
    %1515 = vrot.lane.b32.xlu0 %v1508, 96
    %v1516 = vpop.permute.xlu0 %1515
    %1517 = vrot.lane.b32.xlu0 %v1509, 96
    %v1518 = vpop.permute.xlu0 %1517
    %v1519 = vsel %vm156, %v1514, %v1516
    %v1520 = vsel %vm156, %v1516, %v1518
    %v1523 = vadd.f32 %v1353, %v1519
    %v1524 = vadd.f32 %v1354, %v1520
    %1525 = vst [vmem:[#allocation9] sm:$0xff] %v1523
    %1526 = vst [vmem:[#allocation9 + $0x8] sm:$0xff] %v1524
    // Predicated region
    $region26: #{tpu_custom_call.1} parent=1 // pred_check
      _
    $region27: #{tpu_custom_call.1} parent=1 // pred_check_branch
      %1528 = sbr.rel (0) target = $region29
    $region28: #{tpu_custom_call.1} parent=1 // pred_region
      %s1530 = ssub.s32 256, 256
      %1531 = vsyncadd [#allocation4], %s1530
      %s1533 = sshll.u32 [#allocation9], 4
      %s1534 = int_to_ptr.vmem [resolvable:$true] %s1533
      %1536 = dma.vmem_to_hbm [thread:$0]  %s1534, 256, %s3, [#allocation4]
    $region29: #{tpu_custom_call.1} parent=1 // pred_fallthru
      _
    // Predicated region
    $region30: #{tpu_custom_call.1} parent=1 // pred_check
      _
    $region31: #{tpu_custom_call.1} parent=1 // pred_check_branch
      %1538 = sbr.rel (0) target = $region33
    $region32: #{tpu_custom_call.1} parent=1 // pred_region
      %1539 = dma.done [#allocation4], 256
    $region33: #{tpu_custom_call.1} parent=1 // pred_fallthru
      _
    %1540 = vsyncpa [#allocation3], 1
    %1541 = vsyncpa [#allocation4], 1
    %1542 = vsyncpa [#allocation5], 1
    %1543 = vsyncpa [#allocation8], 1

</llo_original>
